<compile_context>
chip_gen: v6e
topology: v6e:2x2x1
jax: 0.10.0
libtpu: 0.0.40
codegen_flags: <defaults>
</compile_context>

<pallas_src>
import functools

import jax
import jax.numpy as jnp
from jax import lax
from jax.experimental import pallas as pl
from jax.experimental.pallas import tpu as pltpu


def _round_up(a, m):
    return (a + m - 1) // m * m


def _mrconv_kernel(x_ref, idxj_ref, idxi_ref, wx_ref, wr_ref, b_ref, o_ref):
    # x_ref:    (C, Np)    bf16   full (padded) vertex set for this batch element
    # idxj_ref: (K, TN)    int32  edge_index[0] ("j") for this vertex tile, lane-dense on N
    # idxi_ref: (K, TN)    int32  edge_index[1] ("i") for this vertex tile
    # wx_ref:   (Cout, C)  bf16   W[:, :C]   (1x1 conv weight acting on x)
    # wr_ref:   (Cout, C)  bf16   W[:, C:]   (1x1 conv weight acting on max-relative feature)
    # b_ref:    (Cout, 1)  f32    bias
    # o_ref:    (Cout, TN) f32    output tile
    C, Np = x_ref.shape
    K, TN = idxj_ref.shape

    t = pl.program_id(1)
    col0 = pl.multiple_of(t * TN, TN)        # start column of this vertex tile (128-aligned)

    x = x_ref[...]                            # (C, Np) bf16, LHS of the gather matmuls
    # Source-vertex iota: m_iota[m, n] = m  (sublanes = source vertex, lanes = tile column).
    m_iota = lax.broadcasted_iota(jnp.int32, (Np, TN), 0)

    def body(k, rel):
        row_j = idxj_ref[pl.ds(k, 1), :]      # (1, TN) int32
        row_i = idxi_ref[pl.ds(k, 1), :]      # (1, TN) int32
        # Signed one-hot difference matrix: +1 at m == idx_j, -1 at m == idx_i.
        s = ((row_j == m_iota).astype(jnp.bfloat16)
             - (row_i == m_iota).astype(jnp.bfloat16))        # (Np, TN), values in {-1,0,1}
        # MXU: (C, Np) @ (Np, TN) -> (C, TN) == x[:, idx_j[k]] - x[:, idx_i[k]] exactly.
        d = jnp.dot(x, s, preferred_element_type=jnp.float32)
        return jnp.maximum(rel, d)            # running max over neighbor slots

    rel = lax.fori_loop(0, K, body,
                        jnp.full((C, TN), -jnp.inf, jnp.float32),
                        unroll=True)          # (C, TN) f32

    # 1x1 conv == two channel matmuls (skip the (2C, N) concatenate), bias, ReLU.
    x_tile = x_ref[:, pl.ds(col0, TN)]        # (C, TN) bf16, columns of this vertex tile
    acc = jnp.dot(wx_ref[...], x_tile, preferred_element_type=jnp.float32)
    acc = acc + jnp.dot(wr_ref[...], rel.astype(jnp.bfloat16),
                        preferred_element_type=jnp.float32)
    acc = acc + b_ref[...]                    # (Cout, 1) broadcast over lanes
    o_ref[...] = jnp.maximum(acc, 0.0).astype(o_ref.dtype)


@functools.partial(jax.jit, static_argnames=())
def mrconv2d_forward(x, x_0, edge_index, weight, bias):
    """x, x_0: (B, C, N, 1) NCHW. edge_index: (2, B, N, K) int32.
    weight: (Cout, 2C, 1, 1). bias: (Cout,). Returns (B, Cout, N, 1)."""
    del x_0  # unused in the reference forward
    # TODO(synk): remove_self_loops has no shape-preserving dense (fixed-K) equivalent;
    # inputs are constructed without self-loops so it is the identity here.
    B, C, N, _ = x.shape
    K = edge_index.shape[-1]
    Cout = weight.shape[0]

    # Lane-dense vertex tiling: pad N to a multiple of 128; tile at 512 when N is large
    # so the per-step working set (one-hot tile + x) fits v7x's 64 MiB / v5e's scoped VMEM.
    TN = 512 if N > 512 else _round_up(N, 128)
    Np = _round_up(N, TN)
    nt = Np // TN

    x3 = x[..., 0].astype(jnp.bfloat16)                       # (B, C, N), bf16 MXU operand
    idx_j = jnp.transpose(edge_index[0].astype(jnp.int32), (0, 2, 1))   # (B, K, N) lane-dense
    idx_i = jnp.transpose(edge_index[1].astype(jnp.int32), (0, 2, 1))
    if Np != N:
        pad = Np - N
        x3 = jnp.pad(x3, ((0, 0), (0, 0), (0, pad)))
        idx_j = jnp.pad(idx_j, ((0, 0), (0, 0), (0, pad)))     # padded cols point at vertex 0
        idx_i = jnp.pad(idx_i, ((0, 0), (0, 0), (0, pad)))

    w2 = weight.reshape(Cout, 2 * C).astype(jnp.bfloat16)
    wx = w2[:, :C]                                             # (Cout, C)
    wr = w2[:, C:]                                             # (Cout, C)
    b2 = bias.reshape(Cout, 1).astype(jnp.float32)

    out = pl.pallas_call(
        _mrconv_kernel,
        out_shape=jax.ShapeDtypeStruct((B, Cout, Np), jnp.float32),
        grid_spec=pltpu.PrefetchScalarGridSpec(
            num_scalar_prefetch=0,
            grid=(B, nt),
            in_specs=[
                # Full padded x per batch (needed as gather-matmul LHS); resident across t.
                pl.BlockSpec((None, C, Np), lambda b, t: (b, 0, 0)),
                pl.BlockSpec((None, K, TN), lambda b, t: (b, 0, t)),
                pl.BlockSpec((None, K, TN), lambda b, t: (b, 0, t)),
                pl.BlockSpec((Cout, C), lambda b, t: (0, 0)),
                pl.BlockSpec((Cout, C), lambda b, t: (0, 0)),
                pl.BlockSpec((Cout, 1), lambda b, t: (0, 0)),
            ],
            out_specs=pl.BlockSpec((None, Cout, TN), lambda b, t: (b, 0, t)),
        ),
        compiler_params=pltpu.CompilerParams(
            dimension_semantics=("parallel", "parallel"),
            vmem_limit_bytes=64 * 1024 * 1024),
    )(x3, idx_j, idx_i, wx, wr, b2)

    return out[:, :, :N, None].astype(x.dtype)                 # back to NCHW (B, Cout, N, 1)


def _ref_forward(x, edge_index, weight, bias):
    """Pure-JAX reference of the PyTorch forward, mirroring the kernel's bf16 MXU operands
    (f32 accumulation), for tight verification."""
    B, C, N, _ = x.shape
    Cout = weight.shape[0]
    xb = x[..., 0].astype(jnp.bfloat16)                        # same operand cast as kernel
    w2 = weight.reshape(Cout, 2 * C).astype(jnp.bfloat16)
    wx, wr = w2[:, :C], w2[:, C:]

    def per_batch(xcb, ij, ii):                                # xcb (C,N) bf16; ij/ii (N,K)
        x_j = xcb[:, ij].astype(jnp.float32)                   # (C, N, K)
        x_i = xcb[:, ii].astype(jnp.float32)
        rel = jnp.max(x_j - x_i, axis=-1)                      # (C, N) f32
        o = (jnp.dot(wx, xcb, preferred_element_type=jnp.float32)
             + jnp.dot(wr, rel.astype(jnp.bfloat16), preferred_element_type=jnp.float32)
             + bias[:, None])
        return jnp.maximum(o, 0.0)

    out = jax.vmap(per_batch)(xb, edge_index[0], edge_index[1])
    return out[..., None].astype(x.dtype)


if __name__ == "__main__":
    B, C, N, K, Cout = 2, 4, 16, 8, 8

    key = jax.random.PRNGKey(0)
    kx, ki, ko, kw, kb = jax.random.split(key, 5)

    x = jax.random.normal(kx, (B, C, N, 1), dtype=jnp.float32)
    x_0 = x  # unused by the forward (matches reference signature)

    # Deterministic edge_index with NO self-loops: j = (i + off) % N, off in [1, N-1].
    idx_i = jax.random.randint(ki, (B, N, K), 0, N, dtype=jnp.int32)
    off = jax.random.randint(ko, (B, N, K), 1, N, dtype=jnp.int32)
    idx_j = (idx_i + off) % N
    edge_index = jnp.stack([idx_j, idx_i], axis=0)             # (2, B, N, K)

    # Conv2d(2C, Cout, kernel_size=1, bias=True) params (PyTorch-default-like uniform init).
    fan_in = 2 * C
    bound = 1.0 / (fan_in ** 0.5)
    weight = jax.random.uniform(kw, (Cout, 2 * C, 1, 1), jnp.float32, -bound, bound)
    bias = jax.random.uniform(kb, (Cout,), jnp.float32, -bound, bound)

    out = mrconv2d_forward(x, x_0, edge_index, weight, bias)
    out = jax.block_until_ready(out)

    ref = _ref_forward(x, edge_index, weight, bias)
    assert out.shape == (B, Cout, N, 1), out.shape
    # bf16 operands / f32 accumulation in both kernel and reference => only tiny
    # accumulation-order differences remain.
    if not bool(jnp.allclose(out, ref, atol=1e-3, rtol=1e-3)):
        raise AssertionError("Pallas MRConv2d output does not match JAX reference")

    print("KERNEL_OK")
</pallas_src>

<mosaic_0001>
module attributes {stable_mosaic.version = 11 : i64} {
  func.func @_mrconv_kernel(%arg0: i32, %arg1: i32, %arg2: memref<1x4x128xbf16, #tpu.memory_space<vmem>>, %arg3: memref<1x8x128xi32, #tpu.memory_space<vmem>>, %arg4: memref<1x8x128xi32, #tpu.memory_space<vmem>>, %arg5: memref<8x4xbf16, #tpu.memory_space<vmem>>, %arg6: memref<8x4xbf16, #tpu.memory_space<vmem>>, %arg7: memref<8x1xf32, #tpu.memory_space<vmem>>, %arg8: memref<1x8x128xf32, #tpu.memory_space<vmem>>) attributes {dimension_semantics = [#tpu.dimension_semantics<parallel>, #tpu.dimension_semantics<parallel>], iteration_bounds = array<i64: 2, 1>, scalar_prefetch = 0 : i64, scratch_operands = 0 : i64, tpu.core_type = #tpu.core_type<tc>, window_params = [{transform_indices = @transform_0, window_bounds = array<i64: 1, 4, 128>}, {transform_indices = @transform_1, window_bounds = array<i64: 1, 8, 128>}, {transform_indices = @transform_2, window_bounds = array<i64: 1, 8, 128>}, {pipeline_mode = #tpu.pipeline_mode<synchronous>, transform_indices = @transform_3, window_bounds = array<i64: 8, 4>}, {pipeline_mode = #tpu.pipeline_mode<synchronous>, transform_indices = @transform_4, window_bounds = array<i64: 8, 4>}, {pipeline_mode = #tpu.pipeline_mode<synchronous>, transform_indices = @transform_5, window_bounds = array<i64: 8, 1>}, {transform_indices = @transform_6, window_bounds = array<i64: 1, 8, 128>}]} {
    %c128_i32 = arith.constant 128 : i32
    %0 = arith.muli %arg1, %c128_i32 : i32
    %1 = tpu.assume_multiple %0, 128 : i32
    %c0 = arith.constant 0 : index
    %c0_0 = arith.constant 0 : index
    %c0_1 = arith.constant 0 : index
    %2 = vector.load %arg2[%c0, %c0_0, %c0_1] : memref<1x4x128xbf16, #tpu.memory_space<vmem>>, vector<1x4x128xbf16>
    %3 = vector.shape_cast %2 : vector<1x4x128xbf16> to vector<4x128xbf16>
    %4 = tpu.iota {dimensions = array<i32: 0>} : vector<128x128xi32>
    %cst = arith.constant 0xFF800000 : f32
    %5 = vector.broadcast %cst : f32 to vector<4x128xf32>
    %c0_i32 = arith.constant 0 : i32
    %c0_2 = arith.constant 0 : index
    %6 = arith.index_cast %c0_i32 : i32 to index
    %c0_3 = arith.constant 0 : index
    %7 = vector.load %arg3[%c0_2, %6, %c0_3] : memref<1x8x128xi32, #tpu.memory_space<vmem>>, vector<1x1x128xi32>
    %8 = vector.shape_cast %7 : vector<1x1x128xi32> to vector<1x128xi32>
    %c0_4 = arith.constant 0 : index
    %9 = arith.index_cast %c0_i32 : i32 to index
    %c0_5 = arith.constant 0 : index
    %10 = vector.load %arg4[%c0_4, %9, %c0_5] : memref<1x8x128xi32, #tpu.memory_space<vmem>>, vector<1x1x128xi32>
    %11 = vector.shape_cast %10 : vector<1x1x128xi32> to vector<1x128xi32>
    %12 = vector.broadcast %8 : vector<1x128xi32> to vector<128x128xi32>
    %13 = arith.cmpi eq, %12, %4 : vector<128x128xi32>
    %14 = arith.extui %13 : vector<128x128xi1> to vector<128x128xi32>
    %15 = arith.sitofp %14 : vector<128x128xi32> to vector<128x128xf32>
    %16 = arith.truncf %15 : vector<128x128xf32> to vector<128x128xbf16>
    %17 = vector.broadcast %11 : vector<1x128xi32> to vector<128x128xi32>
    %18 = arith.cmpi eq, %17, %4 : vector<128x128xi32>
    %19 = arith.extui %18 : vector<128x128xi1> to vector<128x128xi32>
    %20 = arith.sitofp %19 : vector<128x128xi32> to vector<128x128xf32>
    %21 = arith.truncf %20 : vector<128x128xf32> to vector<128x128xbf16>
    %22 = arith.subf %16, %21 : vector<128x128xbf16>
    %cst_6 = arith.constant dense<0.000000e+00> : vector<4x128xf32>
    %23 = tpu.matmul %3, %22, %cst_6 {dimension_numbers = #tpu.dot_dimension_numbers<[1], [0], [0], [1], [0, 0, 1, 1], [], []>} : vector<4x128xbf16>, vector<128x128xbf16>, vector<4x128xf32> -> vector<4x128xf32>
    %24 = arith.maximumf %5, %23 : vector<4x128xf32>
    %c1_i32 = arith.constant 1 : i32
    %c0_7 = arith.constant 0 : index
    %25 = arith.index_cast %c1_i32 : i32 to index
    %c0_8 = arith.constant 0 : index
    %26 = vector.load %arg3[%c0_7, %25, %c0_8] : memref<1x8x128xi32, #tpu.memory_space<vmem>>, vector<1x1x128xi32>
    %27 = vector.shape_cast %26 : vector<1x1x128xi32> to vector<1x128xi32>
    %c0_9 = arith.constant 0 : index
    %28 = arith.index_cast %c1_i32 : i32 to index
    %c0_10 = arith.constant 0 : index
    %29 = vector.load %arg4[%c0_9, %28, %c0_10] : memref<1x8x128xi32, #tpu.memory_space<vmem>>, vector<1x1x128xi32>
    %30 = vector.shape_cast %29 : vector<1x1x128xi32> to vector<1x128xi32>
    %31 = vector.broadcast %27 : vector<1x128xi32> to vector<128x128xi32>
    %32 = arith.cmpi eq, %31, %4 : vector<128x128xi32>
    %33 = arith.extui %32 : vector<128x128xi1> to vector<128x128xi32>
    %34 = arith.sitofp %33 : vector<128x128xi32> to vector<128x128xf32>
    %35 = arith.truncf %34 : vector<128x128xf32> to vector<128x128xbf16>
    %36 = vector.broadcast %30 : vector<1x128xi32> to vector<128x128xi32>
    %37 = arith.cmpi eq, %36, %4 : vector<128x128xi32>
    %38 = arith.extui %37 : vector<128x128xi1> to vector<128x128xi32>
    %39 = arith.sitofp %38 : vector<128x128xi32> to vector<128x128xf32>
    %40 = arith.truncf %39 : vector<128x128xf32> to vector<128x128xbf16>
    %41 = arith.subf %35, %40 : vector<128x128xbf16>
    %cst_11 = arith.constant dense<0.000000e+00> : vector<4x128xf32>
    %42 = tpu.matmul %3, %41, %cst_11 {dimension_numbers = #tpu.dot_dimension_numbers<[1], [0], [0], [1], [0, 0, 1, 1], [], []>} : vector<4x128xbf16>, vector<128x128xbf16>, vector<4x128xf32> -> vector<4x128xf32>
    %43 = arith.maximumf %24, %42 : vector<4x128xf32>
    %c2_i32 = arith.constant 2 : i32
    %c0_12 = arith.constant 0 : index
    %44 = arith.index_cast %c2_i32 : i32 to index
    %c0_13 = arith.constant 0 : index
    %45 = vector.load %arg3[%c0_12, %44, %c0_13] : memref<1x8x128xi32, #tpu.memory_space<vmem>>, vector<1x1x128xi32>
    %46 = vector.shape_cast %45 : vector<1x1x128xi32> to vector<1x128xi32>
    %c0_14 = arith.constant 0 : index
    %47 = arith.index_cast %c2_i32 : i32 to index
    %c0_15 = arith.constant 0 : index
    %48 = vector.load %arg4[%c0_14, %47, %c0_15] : memref<1x8x128xi32, #tpu.memory_space<vmem>>, vector<1x1x128xi32>
    %49 = vector.shape_cast %48 : vector<1x1x128xi32> to vector<1x128xi32>
    %50 = vector.broadcast %46 : vector<1x128xi32> to vector<128x128xi32>
    %51 = arith.cmpi eq, %50, %4 : vector<128x128xi32>
    %52 = arith.extui %51 : vector<128x128xi1> to vector<128x128xi32>
    %53 = arith.sitofp %52 : vector<128x128xi32> to vector<128x128xf32>
    %54 = arith.truncf %53 : vector<128x128xf32> to vector<128x128xbf16>
    %55 = vector.broadcast %49 : vector<1x128xi32> to vector<128x128xi32>
    %56 = arith.cmpi eq, %55, %4 : vector<128x128xi32>
    %57 = arith.extui %56 : vector<128x128xi1> to vector<128x128xi32>
    %58 = arith.sitofp %57 : vector<128x128xi32> to vector<128x128xf32>
    %59 = arith.truncf %58 : vector<128x128xf32> to vector<128x128xbf16>
    %60 = arith.subf %54, %59 : vector<128x128xbf16>
    %cst_16 = arith.constant dense<0.000000e+00> : vector<4x128xf32>
    %61 = tpu.matmul %3, %60, %cst_16 {dimension_numbers = #tpu.dot_dimension_numbers<[1], [0], [0], [1], [0, 0, 1, 1], [], []>} : vector<4x128xbf16>, vector<128x128xbf16>, vector<4x128xf32> -> vector<4x128xf32>
    %62 = arith.maximumf %43, %61 : vector<4x128xf32>
    %c3_i32 = arith.constant 3 : i32
    %c0_17 = arith.constant 0 : index
    %63 = arith.index_cast %c3_i32 : i32 to index
    %c0_18 = arith.constant 0 : index
    %64 = vector.load %arg3[%c0_17, %63, %c0_18] : memref<1x8x128xi32, #tpu.memory_space<vmem>>, vector<1x1x128xi32>
    %65 = vector.shape_cast %64 : vector<1x1x128xi32> to vector<1x128xi32>
    %c0_19 = arith.constant 0 : index
    %66 = arith.index_cast %c3_i32 : i32 to index
    %c0_20 = arith.constant 0 : index
    %67 = vector.load %arg4[%c0_19, %66, %c0_20] : memref<1x8x128xi32, #tpu.memory_space<vmem>>, vector<1x1x128xi32>
    %68 = vector.shape_cast %67 : vector<1x1x128xi32> to vector<1x128xi32>
    %69 = vector.broadcast %65 : vector<1x128xi32> to vector<128x128xi32>
    %70 = arith.cmpi eq, %69, %4 : vector<128x128xi32>
    %71 = arith.extui %70 : vector<128x128xi1> to vector<128x128xi32>
    %72 = arith.sitofp %71 : vector<128x128xi32> to vector<128x128xf32>
    %73 = arith.truncf %72 : vector<128x128xf32> to vector<128x128xbf16>
    %74 = vector.broadcast %68 : vector<1x128xi32> to vector<128x128xi32>
    %75 = arith.cmpi eq, %74, %4 : vector<128x128xi32>
    %76 = arith.extui %75 : vector<128x128xi1> to vector<128x128xi32>
    %77 = arith.sitofp %76 : vector<128x128xi32> to vector<128x128xf32>
    %78 = arith.truncf %77 : vector<128x128xf32> to vector<128x128xbf16>
    %79 = arith.subf %73, %78 : vector<128x128xbf16>
    %cst_21 = arith.constant dense<0.000000e+00> : vector<4x128xf32>
    %80 = tpu.matmul %3, %79, %cst_21 {dimension_numbers = #tpu.dot_dimension_numbers<[1], [0], [0], [1], [0, 0, 1, 1], [], []>} : vector<4x128xbf16>, vector<128x128xbf16>, vector<4x128xf32> -> vector<4x128xf32>
    %81 = arith.maximumf %62, %80 : vector<4x128xf32>
    %c4_i32 = arith.constant 4 : i32
    %c0_22 = arith.constant 0 : index
    %82 = arith.index_cast %c4_i32 : i32 to index
    %c0_23 = arith.constant 0 : index
    %83 = vector.load %arg3[%c0_22, %82, %c0_23] : memref<1x8x128xi32, #tpu.memory_space<vmem>>, vector<1x1x128xi32>
    %84 = vector.shape_cast %83 : vector<1x1x128xi32> to vector<1x128xi32>
    %c0_24 = arith.constant 0 : index
    %85 = arith.index_cast %c4_i32 : i32 to index
    %c0_25 = arith.constant 0 : index
    %86 = vector.load %arg4[%c0_24, %85, %c0_25] : memref<1x8x128xi32, #tpu.memory_space<vmem>>, vector<1x1x128xi32>
    %87 = vector.shape_cast %86 : vector<1x1x128xi32> to vector<1x128xi32>
    %88 = vector.broadcast %84 : vector<1x128xi32> to vector<128x128xi32>
    %89 = arith.cmpi eq, %88, %4 : vector<128x128xi32>
    %90 = arith.extui %89 : vector<128x128xi1> to vector<128x128xi32>
    %91 = arith.sitofp %90 : vector<128x128xi32> to vector<128x128xf32>
    %92 = arith.truncf %91 : vector<128x128xf32> to vector<128x128xbf16>
    %93 = vector.broadcast %87 : vector<1x128xi32> to vector<128x128xi32>
    %94 = arith.cmpi eq, %93, %4 : vector<128x128xi32>
    %95 = arith.extui %94 : vector<128x128xi1> to vector<128x128xi32>
    %96 = arith.sitofp %95 : vector<128x128xi32> to vector<128x128xf32>
    %97 = arith.truncf %96 : vector<128x128xf32> to vector<128x128xbf16>
    %98 = arith.subf %92, %97 : vector<128x128xbf16>
    %cst_26 = arith.constant dense<0.000000e+00> : vector<4x128xf32>
    %99 = tpu.matmul %3, %98, %cst_26 {dimension_numbers = #tpu.dot_dimension_numbers<[1], [0], [0], [1], [0, 0, 1, 1], [], []>} : vector<4x128xbf16>, vector<128x128xbf16>, vector<4x128xf32> -> vector<4x128xf32>
    %100 = arith.maximumf %81, %99 : vector<4x128xf32>
    %c5_i32 = arith.constant 5 : i32
    %c0_27 = arith.constant 0 : index
    %101 = arith.index_cast %c5_i32 : i32 to index
    %c0_28 = arith.constant 0 : index
    %102 = vector.load %arg3[%c0_27, %101, %c0_28] : memref<1x8x128xi32, #tpu.memory_space<vmem>>, vector<1x1x128xi32>
    %103 = vector.shape_cast %102 : vector<1x1x128xi32> to vector<1x128xi32>
    %c0_29 = arith.constant 0 : index
    %104 = arith.index_cast %c5_i32 : i32 to index
    %c0_30 = arith.constant 0 : index
    %105 = vector.load %arg4[%c0_29, %104, %c0_30] : memref<1x8x128xi32, #tpu.memory_space<vmem>>, vector<1x1x128xi32>
    %106 = vector.shape_cast %105 : vector<1x1x128xi32> to vector<1x128xi32>
    %107 = vector.broadcast %103 : vector<1x128xi32> to vector<128x128xi32>
    %108 = arith.cmpi eq, %107, %4 : vector<128x128xi32>
    %109 = arith.extui %108 : vector<128x128xi1> to vector<128x128xi32>
    %110 = arith.sitofp %109 : vector<128x128xi32> to vector<128x128xf32>
    %111 = arith.truncf %110 : vector<128x128xf32> to vector<128x128xbf16>
    %112 = vector.broadcast %106 : vector<1x128xi32> to vector<128x128xi32>
    %113 = arith.cmpi eq, %112, %4 : vector<128x128xi32>
    %114 = arith.extui %113 : vector<128x128xi1> to vector<128x128xi32>
    %115 = arith.sitofp %114 : vector<128x128xi32> to vector<128x128xf32>
    %116 = arith.truncf %115 : vector<128x128xf32> to vector<128x128xbf16>
    %117 = arith.subf %111, %116 : vector<128x128xbf16>
    %cst_31 = arith.constant dense<0.000000e+00> : vector<4x128xf32>
    %118 = tpu.matmul %3, %117, %cst_31 {dimension_numbers = #tpu.dot_dimension_numbers<[1], [0], [0], [1], [0, 0, 1, 1], [], []>} : vector<4x128xbf16>, vector<128x128xbf16>, vector<4x128xf32> -> vector<4x128xf32>
    %119 = arith.maximumf %100, %118 : vector<4x128xf32>
    %c6_i32 = arith.constant 6 : i32
    %c0_32 = arith.constant 0 : index
    %120 = arith.index_cast %c6_i32 : i32 to index
    %c0_33 = arith.constant 0 : index
    %121 = vector.load %arg3[%c0_32, %120, %c0_33] : memref<1x8x128xi32, #tpu.memory_space<vmem>>, vector<1x1x128xi32>
    %122 = vector.shape_cast %121 : vector<1x1x128xi32> to vector<1x128xi32>
    %c0_34 = arith.constant 0 : index
    %123 = arith.index_cast %c6_i32 : i32 to index
    %c0_35 = arith.constant 0 : index
    %124 = vector.load %arg4[%c0_34, %123, %c0_35] : memref<1x8x128xi32, #tpu.memory_space<vmem>>, vector<1x1x128xi32>
    %125 = vector.shape_cast %124 : vector<1x1x128xi32> to vector<1x128xi32>
    %126 = vector.broadcast %122 : vector<1x128xi32> to vector<128x128xi32>
    %127 = arith.cmpi eq, %126, %4 : vector<128x128xi32>
    %128 = arith.extui %127 : vector<128x128xi1> to vector<128x128xi32>
    %129 = arith.sitofp %128 : vector<128x128xi32> to vector<128x128xf32>
    %130 = arith.truncf %129 : vector<128x128xf32> to vector<128x128xbf16>
    %131 = vector.broadcast %125 : vector<1x128xi32> to vector<128x128xi32>
    %132 = arith.cmpi eq, %131, %4 : vector<128x128xi32>
    %133 = arith.extui %132 : vector<128x128xi1> to vector<128x128xi32>
    %134 = arith.sitofp %133 : vector<128x128xi32> to vector<128x128xf32>
    %135 = arith.truncf %134 : vector<128x128xf32> to vector<128x128xbf16>
    %136 = arith.subf %130, %135 : vector<128x128xbf16>
    %cst_36 = arith.constant dense<0.000000e+00> : vector<4x128xf32>
    %137 = tpu.matmul %3, %136, %cst_36 {dimension_numbers = #tpu.dot_dimension_numbers<[1], [0], [0], [1], [0, 0, 1, 1], [], []>} : vector<4x128xbf16>, vector<128x128xbf16>, vector<4x128xf32> -> vector<4x128xf32>
    %138 = arith.maximumf %119, %137 : vector<4x128xf32>
    %c7_i32 = arith.constant 7 : i32
    %c0_37 = arith.constant 0 : index
    %139 = arith.index_cast %c7_i32 : i32 to index
    %c0_38 = arith.constant 0 : index
    %140 = vector.load %arg3[%c0_37, %139, %c0_38] : memref<1x8x128xi32, #tpu.memory_space<vmem>>, vector<1x1x128xi32>
    %141 = vector.shape_cast %140 : vector<1x1x128xi32> to vector<1x128xi32>
    %c0_39 = arith.constant 0 : index
    %142 = arith.index_cast %c7_i32 : i32 to index
    %c0_40 = arith.constant 0 : index
    %143 = vector.load %arg4[%c0_39, %142, %c0_40] : memref<1x8x128xi32, #tpu.memory_space<vmem>>, vector<1x1x128xi32>
    %144 = vector.shape_cast %143 : vector<1x1x128xi32> to vector<1x128xi32>
    %145 = vector.broadcast %141 : vector<1x128xi32> to vector<128x128xi32>
    %146 = arith.cmpi eq, %145, %4 : vector<128x128xi32>
    %147 = arith.extui %146 : vector<128x128xi1> to vector<128x128xi32>
    %148 = arith.sitofp %147 : vector<128x128xi32> to vector<128x128xf32>
    %149 = arith.truncf %148 : vector<128x128xf32> to vector<128x128xbf16>
    %150 = vector.broadcast %144 : vector<1x128xi32> to vector<128x128xi32>
    %151 = arith.cmpi eq, %150, %4 : vector<128x128xi32>
    %152 = arith.extui %151 : vector<128x128xi1> to vector<128x128xi32>
    %153 = arith.sitofp %152 : vector<128x128xi32> to vector<128x128xf32>
    %154 = arith.truncf %153 : vector<128x128xf32> to vector<128x128xbf16>
    %155 = arith.subf %149, %154 : vector<128x128xbf16>
    %cst_41 = arith.constant dense<0.000000e+00> : vector<4x128xf32>
    %156 = tpu.matmul %3, %155, %cst_41 {dimension_numbers = #tpu.dot_dimension_numbers<[1], [0], [0], [1], [0, 0, 1, 1], [], []>} : vector<4x128xbf16>, vector<128x128xbf16>, vector<4x128xf32> -> vector<4x128xf32>
    %157 = arith.maximumf %138, %156 : vector<4x128xf32>
    %c8_i32 = arith.constant 8 : i32
    %c0_42 = arith.constant 0 : index
    %c0_43 = arith.constant 0 : index
    %158 = arith.index_cast %1 : i32 to index
    %159 = vector.load %arg2[%c0_42, %c0_43, %158] : memref<1x4x128xbf16, #tpu.memory_space<vmem>>, vector<1x4x128xbf16>
    %160 = vector.shape_cast %159 : vector<1x4x128xbf16> to vector<4x128xbf16>
    %c0_44 = arith.constant 0 : index
    %c0_45 = arith.constant 0 : index
    %161 = vector.load %arg5[%c0_44, %c0_45] : memref<8x4xbf16, #tpu.memory_space<vmem>>, vector<8x4xbf16>
    %cst_46 = arith.constant dense<0.000000e+00> : vector<8x128xf32>
    %162 = tpu.matmul %161, %160, %cst_46 {dimension_numbers = #tpu.dot_dimension_numbers<[1], [0], [0], [1], [0, 0, 1, 1], [], []>} : vector<8x4xbf16>, vector<4x128xbf16>, vector<8x128xf32> -> vector<8x128xf32>
    %c0_47 = arith.constant 0 : index
    %c0_48 = arith.constant 0 : index
    %163 = vector.load %arg6[%c0_47, %c0_48] : memref<8x4xbf16, #tpu.memory_space<vmem>>, vector<8x4xbf16>
    %164 = arith.truncf %157 : vector<4x128xf32> to vector<4x128xbf16>
    %cst_49 = arith.constant dense<0.000000e+00> : vector<8x128xf32>
    %165 = tpu.matmul %163, %164, %cst_49 {dimension_numbers = #tpu.dot_dimension_numbers<[1], [0], [0], [1], [0, 0, 1, 1], [], []>} : vector<8x4xbf16>, vector<4x128xbf16>, vector<8x128xf32> -> vector<8x128xf32>
    %166 = arith.addf %162, %165 : vector<8x128xf32>
    %c0_50 = arith.constant 0 : index
    %c0_51 = arith.constant 0 : index
    %167 = vector.load %arg7[%c0_50, %c0_51] : memref<8x1xf32, #tpu.memory_space<vmem>>, vector<8x1xf32>
    %168 = vector.broadcast %167 : vector<8x1xf32> to vector<8x128xf32>
    %169 = arith.addf %166, %168 : vector<8x128xf32>
    %cst_52 = arith.constant 0.000000e+00 : f32
    %170 = vector.broadcast %cst_52 : f32 to vector<8x128xf32>
    %171 = arith.maximumf %169, %170 : vector<8x128xf32>
    %c0_53 = arith.constant 0 : index
    %c0_54 = arith.constant 0 : index
    %c0_55 = arith.constant 0 : index
    %172 = vector.load %arg8[%c0_53, %c0_54, %c0_55] : memref<1x8x128xf32, #tpu.memory_space<vmem>>, vector<1x8x128xf32>
    %173 = vector.shape_cast %172 : vector<1x8x128xf32> to vector<8x128xf32>
    %174 = vector.shape_cast %171 : vector<8x128xf32> to vector<1x8x128xf32>
    tpu.vector_store %arg8[%c0_53, %c0_54, %c0_55], %174 {strides = array<i32>} : memref<1x8x128xf32, #tpu.memory_space<vmem>>, vector<1x8x128xf32>,
    return
  }
  func.func @transform_0(%arg0: i32, %arg1: i32) -> (i32, i32, i32) {
    %c0_i32 = arith.constant 0 : i32
    %c0_i32_0 = arith.constant 0 : i32
    %c0_i32_1 = arith.constant 0 : i32
    return %arg0, %c0_i32, %c0_i32_0 : i32, i32, i32
  }
  func.func @transform_1(%arg0: i32, %arg1: i32) -> (i32, i32, i32) {
    %c0_i32 = arith.constant 0 : i32
    %c0_i32_0 = arith.constant 0 : i32
    return %arg0, %c0_i32, %arg1 : i32, i32, i32
  }
  func.func @transform_2(%arg0: i32, %arg1: i32) -> (i32, i32, i32) {
    %c0_i32 = arith.constant 0 : i32
    %c0_i32_0 = arith.constant 0 : i32
    return %arg0, %c0_i32, %arg1 : i32, i32, i32
  }
  func.func @transform_3(%arg0: i32, %arg1: i32) -> (i32, i32) {
    %c0_i32 = arith.constant 0 : i32
    %c0_i32_0 = arith.constant 0 : i32
    %c0_i32_1 = arith.constant 0 : i32
    return %c0_i32, %c0_i32_0 : i32, i32
  }
  func.func @transform_4(%arg0: i32, %arg1: i32) -> (i32, i32) {
    %c0_i32 = arith.constant 0 : i32
    %c0_i32_0 = arith.constant 0 : i32
    %c0_i32_1 = arith.constant 0 : i32
    return %c0_i32, %c0_i32_0 : i32, i32
  }
  func.func @transform_5(%arg0: i32, %arg1: i32) -> (i32, i32) {
    %c0_i32 = arith.constant 0 : i32
    %c0_i32_0 = arith.constant 0 : i32
    %c0_i32_1 = arith.constant 0 : i32
    return %c0_i32, %c0_i32_0 : i32, i32
  }
  func.func @transform_6(%arg0: i32, %arg1: i32) -> (i32, i32, i32) {
    %c0_i32 = arith.constant 0 : i32
    %c0_i32_0 = arith.constant 0 : i32
    return %arg0, %c0_i32, %arg1 : i32, i32, i32
  }
}

</mosaic_0001>

<llo_original>
// kernel: mrconv2d_forward.1
$region0: #{mrconv2d_forward.1}
  #allocation0 [shape = 'u32[]', space=smem, size = 0x4, offset = 0x4, fixed_abs, tag = 'smem constant byte address 0x4 - core index']
  #allocation1 [shape = 'u32[144,128]{1,0:T(1,128)}', space=vmem, size = 0x12000, scoped, tag = 'internal scratch']
  %s0 = inlined_call_operand.vmem [shape: bf16[2,4,128], index: 0, kind: input, shape index: {}]
  %s1 = inlined_call_operand.vmem [shape: s32[2,8,128], index: 1, kind: input, shape index: {}]
  %s2 = inlined_call_operand.vmem [shape: s32[2,8,128], index: 2, kind: input, shape index: {}]
  %s3 = inlined_call_operand.vmem [shape: bf16[8,4], index: 3, kind: input, shape index: {}]
  %s4 = inlined_call_operand.vmem [shape: bf16[8,4], index: 4, kind: input, shape index: {}]
  %s5 = inlined_call_operand.vmem [shape: f32[8,1], index: 5, kind: input, shape index: {}]
  %s6 = inlined_call_operand.hbm [shape: f32[2,8,128], index: 6, kind: output, shape index: {}]
  %s7 = sld [smem:[#allocation0]]
  $region57: #{mrconv2d_forward.1} parent=0
    _
  %s9 = ssub.s32 1, %s7
  %s10 = scalar_select 0, %s9, %s7
  $region1: #{mrconv2d_forward.1} parent=0
    #allocation2 [shape = 'u8[8192]{0}', space=vmem, size = 0x2000, scoped, tag = 'output window, operand 0']
    #allocation3 [shape = 's32[2]{0}', space=sflag, size = 0x8, scoped, tag = 'scoped memory for mrconv2d_forward.1']
    %11 = vsyncpa [#allocation3], 0
    %s12 = scalar_lea.sflag [#allocation3], 1
    %13 = vsyncpa %s12, 0
    loop: start=0, step=1, limit=4
    $region2: #{mrconv2d_forward.1} parent=1 // loop_pre_header
      _
    $region3: #{mrconv2d_forward.1} parent=1 // loop_header
      %s15 = sphi 0, %s19
      %p16 = scmp.ge.s32.totalorder %s15, 4
      %s22 = sphi 0, %s34
      %s23 = sphi 0, %s30
      %s24 = sphi 0, %s22
      %s25 = sphi 0, %s23
      %s26 = sphi 0, %s24
      %s27 = sphi 0, %s25
      %s37 = sphi 0, %s39
      %s40 = sphi 0, %s37
      %s41 = sphi 0, %s40
      %s57 = sphi 0, %s41
      %s65 = sphi 0, %s67
      %s68 = sphi 0, %s65
      %s69 = sphi 0, %s68
      %s85 = sphi 0, %s69
      %s93 = sphi 0, %s95
      %s96 = sphi 0, %s93
      %s97 = sphi 0, %s96
      %s113 = sphi 0, %s97
      %s117 = sphi 0, %s117
      %s119 = sphi 0, %s117
      %s120 = sphi 0, %s119
      %s134 = sphi 0, %s120
      %s138 = sphi 0, %s138
      %s140 = sphi 0, %s138
      %s141 = sphi 0, %s140
      %s155 = sphi 0, %s141
      %s159 = sphi 0, %s159
      %s161 = sphi 0, %s159
      %s162 = sphi 0, %s161
      %s176 = sphi 0, %s162
      %s184 = sphi 0, %s186
      %s187 = sphi 0, %s184
      %s188 = sphi 0, %s187
      %s204 = sphi 0, %s188
    $region4: #{mrconv2d_forward.1} parent=1 // loop_header_branch
      %18 = sbr.rel (%p16) target = $region8
    $region5: #{mrconv2d_forward.1} parent=1 // loop_body
      %s20 = ssub.s32 %s15, 1
      %s21 = ssub.s32 %s15, 2
      %s28 = sadd.s32 1, %s23
      %p29 = scmp.ge.s32.totalorder %s28, 1
      %s30 = scalar_select %p29, 0, %s28
      %s31 = sadd.s32 1, %s22
      %s32 = scalar_select %p29, %s31, %s22
      %p33 = scmp.ge.s32.totalorder %s32, 2
      %s34 = scalar_select %p33, 0, %s32
      %s35 = ssub.s32 %s22, %s34
      %p36 = scmp.eq.s32.totalorder %s35, 0
      %s38 = sadd.s32 %s37, 1
      %s39 = scalar_select %p36, %s37, %s38
      %p42 = pneg %p36
      %p43 = scmp.eq.s32.totalorder %s15, 1
      %p44 = por %p42, %p43
      %p45 = scmp.ne.s32.totalorder %s37, %s40
      %p46 = scmp.eq.s32.totalorder %s15, 0
      %p47 = por %p45, %p46
      %p48 = scmp.ne.s32.totalorder %s37, %s40
      %p49 = scmp.eq.s32.totalorder %s20, 1
      %p50 = por %p48, %p49
      %p51 = scmp.ne.s32.totalorder %s40, %s41
      %p52 = scmp.eq.s32.totalorder %s20, 0
      %p53 = por %p51, %p52
      %p54 = scmp.ne.s32.totalorder %s40, %s41
      %p55 = scmp.eq.s32.totalorder %s21, 1
      %p56 = por %p54, %p55
      %p58 = scmp.ne.s32.totalorder %s41, %s57
      %p59 = scmp.eq.s32.totalorder %s21, 0
      %p60 = por %p58, %p59
      %s61 = ssub.s32 %s22, %s34
      %s62 = ssub.s32 %s23, %s30
      %s63 = sor.u32 %s61, %s62
      %p64 = scmp.eq.s32.totalorder %s63, 0
      %s66 = sadd.s32 %s65, 1
      %s67 = scalar_select %p64, %s65, %s66
      %p70 = pneg %p64
      %p71 = scmp.eq.s32.totalorder %s15, 1
      %p72 = por %p70, %p71
      %p73 = scmp.ne.s32.totalorder %s65, %s68
      %p74 = scmp.eq.s32.totalorder %s15, 0
      %p75 = por %p73, %p74
      %p76 = scmp.ne.s32.totalorder %s65, %s68
      %p77 = scmp.eq.s32.totalorder %s20, 1
      %p78 = por %p76, %p77
      %p79 = scmp.ne.s32.totalorder %s68, %s69
      %p80 = scmp.eq.s32.totalorder %s20, 0
      %p81 = por %p79, %p80
      %p82 = scmp.ne.s32.totalorder %s68, %s69
      %p83 = scmp.eq.s32.totalorder %s21, 1
      %p84 = por %p82, %p83
      %p86 = scmp.ne.s32.totalorder %s69, %s85
      %p87 = scmp.eq.s32.totalorder %s21, 0
      %p88 = por %p86, %p87
      %s89 = ssub.s32 %s22, %s34
      %s90 = ssub.s32 %s23, %s30
      %s91 = sor.u32 %s89, %s90
      %p92 = scmp.eq.s32.totalorder %s91, 0
      %s94 = sadd.s32 %s93, 1
      %s95 = scalar_select %p92, %s93, %s94
      %p98 = pneg %p92
      %p99 = scmp.eq.s32.totalorder %s15, 1
      %p100 = por %p98, %p99
      %p101 = scmp.ne.s32.totalorder %s93, %s96
      %p102 = scmp.eq.s32.totalorder %s15, 0
      %p103 = por %p101, %p102
      %p104 = scmp.ne.s32.totalorder %s93, %s96
      %p105 = scmp.eq.s32.totalorder %s20, 1
      %p106 = por %p104, %p105
      %p107 = scmp.ne.s32.totalorder %s96, %s97
      %p108 = scmp.eq.s32.totalorder %s20, 0
      %p109 = por %p107, %p108
      %p110 = scmp.ne.s32.totalorder %s96, %s97
      %p111 = scmp.eq.s32.totalorder %s21, 1
      %p112 = por %p110, %p111
      %p114 = scmp.ne.s32.totalorder %s97, %s113
      %p115 = scmp.eq.s32.totalorder %s21, 0
      %p116 = por %p114, %p115
      %s118 = sadd.s32 %s117, 1
      %p121 = scmp.eq.s32.totalorder %s15, 1
      %p122 = scmp.ne.s32.totalorder %s117, %s119
      %p123 = scmp.eq.s32.totalorder %s15, 0
      %p124 = por %p122, %p123
      %p125 = scmp.ne.s32.totalorder %s117, %s119
      %p126 = scmp.eq.s32.totalorder %s20, 1
      %p127 = por %p125, %p126
      %p128 = scmp.ne.s32.totalorder %s119, %s120
      %p129 = scmp.eq.s32.totalorder %s20, 0
      %p130 = por %p128, %p129
      %p131 = scmp.ne.s32.totalorder %s119, %s120
      %p132 = scmp.eq.s32.totalorder %s21, 1
      %p133 = por %p131, %p132
      %p135 = scmp.ne.s32.totalorder %s120, %s134
      %p136 = scmp.eq.s32.totalorder %s21, 0
      %p137 = por %p135, %p136
      %s139 = sadd.s32 %s138, 1
      %p142 = scmp.eq.s32.totalorder %s15, 1
      %p143 = scmp.ne.s32.totalorder %s138, %s140
      %p144 = scmp.eq.s32.totalorder %s15, 0
      %p145 = por %p143, %p144
      %p146 = scmp.ne.s32.totalorder %s138, %s140
      %p147 = scmp.eq.s32.totalorder %s20, 1
      %p148 = por %p146, %p147
      %p149 = scmp.ne.s32.totalorder %s140, %s141
      %p150 = scmp.eq.s32.totalorder %s20, 0
      %p151 = por %p149, %p150
      %p152 = scmp.ne.s32.totalorder %s140, %s141
      %p153 = scmp.eq.s32.totalorder %s21, 1
      %p154 = por %p152, %p153
      %p156 = scmp.ne.s32.totalorder %s141, %s155
      %p157 = scmp.eq.s32.totalorder %s21, 0
      %p158 = por %p156, %p157
      %s160 = sadd.s32 %s159, 1
      %p163 = scmp.eq.s32.totalorder %s15, 1
      %p164 = scmp.ne.s32.totalorder %s159, %s161
      %p165 = scmp.eq.s32.totalorder %s15, 0
      %p166 = por %p164, %p165
      %p167 = scmp.ne.s32.totalorder %s159, %s161
      %p168 = scmp.eq.s32.totalorder %s20, 1
      %p169 = por %p167, %p168
      %p170 = scmp.ne.s32.totalorder %s161, %s162
      %p171 = scmp.eq.s32.totalorder %s20, 0
      %p172 = por %p170, %p171
      %p173 = scmp.ne.s32.totalorder %s161, %s162
      %p174 = scmp.eq.s32.totalorder %s21, 1
      %p175 = por %p173, %p174
      %p177 = scmp.ne.s32.totalorder %s162, %s176
      %p178 = scmp.eq.s32.totalorder %s21, 0
      %p179 = por %p177, %p178
      %s180 = ssub.s32 %s22, %s34
      %s181 = ssub.s32 %s23, %s30
      %s182 = sor.u32 %s180, %s181
      %p183 = scmp.eq.s32.totalorder %s182, 0
      %s185 = sadd.s32 %s184, 1
      %s186 = scalar_select %p183, %s184, %s185
      %p189 = pneg %p183
      %p190 = scmp.eq.s32.totalorder %s15, 1
      %p191 = por %p189, %p190
      %p192 = scmp.ne.s32.totalorder %s184, %s187
      %p193 = scmp.eq.s32.totalorder %s15, 0
      %p194 = por %p192, %p193
      %p195 = scmp.ne.s32.totalorder %s184, %s187
      %p196 = scmp.eq.s32.totalorder %s20, 1
      %p197 = por %p195, %p196
      %p198 = scmp.ne.s32.totalorder %s187, %s188
      %p199 = scmp.eq.s32.totalorder %s20, 0
      %p200 = por %p198, %p199
      %p201 = scmp.ne.s32.totalorder %s187, %s188
      %p202 = scmp.eq.s32.totalorder %s21, 1
      %p203 = por %p201, %p202
      %p205 = scmp.ne.s32.totalorder %s188, %s204
      %p206 = scmp.eq.s32.totalorder %s21, 0
      %p207 = por %p205, %p206
      %p208 = scmp.le.s32.totalorder 1, %s15
      %p209 = scmp.lt.s32.totalorder %s15, 3
      %p210 = pnand %p208, %p209
      %p211 = pneg %p210
      // Predicated region
      $region9: #{mrconv2d_forward.1} parent=5 // pred_check
        _
      $region10: #{mrconv2d_forward.1} parent=5 // pred_check_branch
        %213 = sbr.rel (%p210) target = $region12
      $region11: #{mrconv2d_forward.1} parent=5 // pred_region
        %s214 = ssub.s32 %s15, 1
        // Predicated region
        $region13: #{mrconv2d_forward.1} parent=11 // pred_check
          %p215 = pneg %p130
        $region14: #{mrconv2d_forward.1} parent=11 // pred_check_branch
          %217 = sbr.rel (%p215) target = $region16
        $region15: #{mrconv2d_forward.1} parent=11 // pred_region
          _
        $region16: #{mrconv2d_forward.1} parent=11 // pred_fallthru
          _
        // Predicated region
        $region17: #{mrconv2d_forward.1} parent=11 // pred_check
          %p218 = pneg %p151
        $region18: #{mrconv2d_forward.1} parent=11 // pred_check_branch
          %220 = sbr.rel (%p218) target = $region20
        $region19: #{mrconv2d_forward.1} parent=11 // pred_region
          _
        $region20: #{mrconv2d_forward.1} parent=11 // pred_fallthru
          _
        // Predicated region
        $region21: #{mrconv2d_forward.1} parent=11 // pred_check
          %p221 = pneg %p172
        $region22: #{mrconv2d_forward.1} parent=11 // pred_check_branch
          %223 = sbr.rel (%p221) target = $region24
        $region23: #{mrconv2d_forward.1} parent=11 // pred_region
          _
        $region24: #{mrconv2d_forward.1} parent=11 // pred_fallthru
          _
      $region12: #{mrconv2d_forward.1} parent=5 // pred_fallthru
        _
      %p224 = scmp.lt.s32.totalorder %s15, 2
      // Predicated region
      $region25: #{mrconv2d_forward.1} parent=5 // pred_check
        %p225 = pneg %p224
      $region26: #{mrconv2d_forward.1} parent=5 // pred_check_branch
        %227 = sbr.rel (%p225) target = $region28
      $region27: #{mrconv2d_forward.1} parent=5 // pred_region
        // Predicated region
        $region29: #{mrconv2d_forward.1} parent=27 // pred_check
          %p228 = pneg %p47
        $region30: #{mrconv2d_forward.1} parent=27 // pred_check_branch
          %230 = sbr.rel (%p228) target = $region32
        $region31: #{mrconv2d_forward.1} parent=27 // pred_region
          %p231 = scmp.lt.s32.totalorder %s22, 1
          %s232 = scalar_select %p231, %s22, 1
          %s233 = smul.addr %s232, 2
          %s234 = scalar_lea.vmem %s0, %s233
        $region32: #{mrconv2d_forward.1} parent=27 // pred_fallthru
          _
        // Predicated region
        $region33: #{mrconv2d_forward.1} parent=27 // pred_check
          %p235 = pneg %p75
        $region34: #{mrconv2d_forward.1} parent=27 // pred_check_branch
          %237 = sbr.rel (%p235) target = $region36
        $region35: #{mrconv2d_forward.1} parent=27 // pred_region
          %p238 = scmp.lt.s32.totalorder %s22, 1
          %s239 = scalar_select %p238, %s22, 1
          %p240 = scmp.lt.s32.totalorder %s23, 0
          %s241 = scalar_select %p240, %s23, 0
          %s242 = sadd.s32 %s241, %s239
          %s243 = smul.addr %s242, 8
          %s244 = scalar_lea.vmem %s1, %s243
        $region36: #{mrconv2d_forward.1} parent=27 // pred_fallthru
          _
        // Predicated region
        $region37: #{mrconv2d_forward.1} parent=27 // pred_check
          %p245 = pneg %p103
        $region38: #{mrconv2d_forward.1} parent=27 // pred_check_branch
          %247 = sbr.rel (%p245) target = $region40
        $region39: #{mrconv2d_forward.1} parent=27 // pred_region
          %p248 = scmp.lt.s32.totalorder %s22, 1
          %s249 = scalar_select %p248, %s22, 1
          %p250 = scmp.lt.s32.totalorder %s23, 0
          %s251 = scalar_select %p250, %s23, 0
          %s252 = sadd.s32 %s251, %s249
          %s253 = smul.addr %s252, 8
          %s254 = scalar_lea.vmem %s2, %s253
        $region40: #{mrconv2d_forward.1} parent=27 // pred_fallthru
          _
      $region28: #{mrconv2d_forward.1} parent=5 // pred_fallthru
        _
      %p255 = scmp.le.s32.totalorder 1, %s15
      %p256 = scmp.lt.s32.totalorder %s15, 3
      %p257 = pnand %p255, %p256
      %p258 = pneg %p257
      // Predicated region
      $region41: #{mrconv2d_forward.1} parent=5 // pred_check
        _
      $region42: #{mrconv2d_forward.1} parent=5 // pred_check_branch
        %260 = sbr.rel (%p257) target = $region44
      $region43: #{mrconv2d_forward.1} parent=5 // pred_region
        %s261 = ssub.s32 %s15, 1
        %p262 = scmp.lt.s32.totalorder %s24, 1
        %s263 = scalar_select %p262, %s24, 1
        %s264 = smul.addr %s263, 2
        %s265 = scalar_lea.vmem %s0, %s264
        %p266 = pneg %p53
        %p267 = pneg %p50
        %p268 = scmp.lt.s32.totalorder %s24, 1
        %s269 = scalar_select %p268, %s24, 1
        %p270 = scmp.lt.s32.totalorder %s25, 0
        %s271 = scalar_select %p270, %s25, 0
        %s272 = sadd.s32 %s271, %s269
        %s273 = smul.addr %s272, 8
        %s274 = scalar_lea.vmem %s1, %s273
        %p275 = pneg %p81
        %p276 = pneg %p78
        %p277 = scmp.lt.s32.totalorder %s24, 1
        %s278 = scalar_select %p277, %s24, 1
        %p279 = scmp.lt.s32.totalorder %s25, 0
        %s280 = scalar_select %p279, %s25, 0
        %s281 = sadd.s32 %s280, %s278
        %s282 = smul.addr %s281, 8
        %s283 = scalar_lea.vmem %s2, %s282
        %p284 = pneg %p109
        %p285 = pneg %p106
        %p286 = pneg %p130
        %p287 = pneg %p127
        %p288 = pneg %p151
        %p289 = pneg %p148
        %p290 = pneg %p172
        %p291 = pneg %p169
        %p292 = pneg %p200
        %p293 = pneg %p197
        %s294 = sand.u32 %s187, 1
        %s295 = scalar_lea.sflag [#allocation3], %s294
        %s296 = sand.u32 %s187, 1
        %s297 = smul.addr %s296, 8
        %s298 = scalar_lea.vmem [#allocation2], %s297
        %p299 = scmp.lt.s32.totalorder %s24, 1
        %s300 = scalar_select %p299, %s24, 1
        %s301 = smul.addr %s300, 2
        %s302 = scalar_lea.vmem %s0, %s301
        %p303 = scmp.lt.s32.totalorder %s24, 1
        %s304 = scalar_select %p303, %s24, 1
        %p305 = scmp.lt.s32.totalorder %s25, 0
        %s306 = scalar_select %p305, %s25, 0
        %s307 = sadd.s32 %s306, %s304
        %s308 = smul.addr %s307, 8
        %s309 = scalar_lea.vmem %s1, %s308
        %p310 = scmp.lt.s32.totalorder %s24, 1
        %s311 = scalar_select %p310, %s24, 1
        %p312 = scmp.lt.s32.totalorder %s25, 0
        %s313 = scalar_select %p312, %s25, 0
        %s314 = sadd.s32 %s313, %s311
        %s315 = smul.addr %s314, 8
        %s316 = scalar_lea.vmem %s2, %s315
        %s318 = smul.u32 %s25, 128
        %v319 = vld [vmem:[%s302] sm:$0x3]
        %v320 = vlaneseq
        %v321 = vshrl.u32 %v320, 7
        %v322 = vadd.s32 %v321, 8
        %v323 = vadd.s32 %v321, 16
        %v324 = vadd.s32 %v321, 24
        %v325 = vadd.s32 %v321, 32
        %v326 = vadd.s32 %v321, 40
        %v327 = vadd.s32 %v321, 48
        %v328 = vadd.s32 %v321, 56
        %v329 = vadd.s32 %v321, 64
        %v330 = vadd.s32 %v321, 72
        %v331 = vadd.s32 %v321, 80
        %v332 = vadd.s32 %v321, 88
        %v333 = vadd.s32 %v321, 96
        %v334 = vadd.s32 %v321, 104
        %v335 = vadd.s32 %v321, 112
        %v336 = vadd.s32 %v321, 120
        %v337 = vld [vmem:[%s309] sm:$0x1]
        %v338 = vld [vmem:[%s316] sm:$0x1]
        %v339 = vlaneseq
        %v340 = vshrl.u32 %v339, 7
        %v341 = vsub.s32 0, %v340
        %v342 = vrot.slane %v337, %v341
        %vm343 = vcmp.eq.s32.totalorder %v342, %v321
        %vm344 = vcmp.eq.s32.totalorder %v342, %v322
        %vm345 = vcmp.eq.s32.totalorder %v342, %v323
        %vm346 = vcmp.eq.s32.totalorder %v342, %v324
        %vm347 = vcmp.eq.s32.totalorder %v342, %v325
        %vm348 = vcmp.eq.s32.totalorder %v342, %v326
        %vm349 = vcmp.eq.s32.totalorder %v342, %v327
        %vm350 = vcmp.eq.s32.totalorder %v342, %v328
        %vm351 = vcmp.eq.s32.totalorder %v342, %v329
        %vm352 = vcmp.eq.s32.totalorder %v342, %v330
        %vm353 = vcmp.eq.s32.totalorder %v342, %v331
        %vm354 = vcmp.eq.s32.totalorder %v342, %v332
        %vm355 = vcmp.eq.s32.totalorder %v342, %v333
        %vm356 = vcmp.eq.s32.totalorder %v342, %v334
        %vm357 = vcmp.eq.s32.totalorder %v342, %v335
        %vm358 = vcmp.eq.s32.totalorder %v342, %v336
        %v359 = vsel %vm343, 1, 0
        %v360 = vsel %vm344, 1, 0
        %v361 = vsel %vm345, 1, 0
        %v362 = vsel %vm346, 1, 0
        %v363 = vsel %vm347, 1, 0
        %v364 = vsel %vm348, 1, 0
        %v365 = vsel %vm349, 1, 0
        %v366 = vsel %vm350, 1, 0
        %v367 = vsel %vm351, 1, 0
        %v368 = vsel %vm352, 1, 0
        %v369 = vsel %vm353, 1, 0
        %v370 = vsel %vm354, 1, 0
        %v371 = vsel %vm355, 1, 0
        %v372 = vsel %vm356, 1, 0
        %v373 = vsel %vm357, 1, 0
        %v374 = vsel %vm358, 1, 0
        %v375 = vcvt.s32.f32 %v359
        %v376 = vcvt.s32.f32 %v360
        %v377 = vcvt.s32.f32 %v361
        %v378 = vcvt.s32.f32 %v362
        %v379 = vcvt.s32.f32 %v363
        %v380 = vcvt.s32.f32 %v364
        %v381 = vcvt.s32.f32 %v365
        %v382 = vcvt.s32.f32 %v366
        %v383 = vcvt.s32.f32 %v367
        %v384 = vcvt.s32.f32 %v368
        %v385 = vcvt.s32.f32 %v369
        %v386 = vcvt.s32.f32 %v370
        %v387 = vcvt.s32.f32 %v371
        %v388 = vcvt.s32.f32 %v372
        %v389 = vcvt.s32.f32 %v373
        %v390 = vcvt.s32.f32 %v374
        %v391 = vpack.c.bf16 %v376, %v375
        %v392 = vpack.c.bf16 %v378, %v377
        %v393 = vpack.c.bf16 %v380, %v379
        %v394 = vpack.c.bf16 %v382, %v381
        %v395 = vpack.c.bf16 %v384, %v383
        %v396 = vpack.c.bf16 %v386, %v385
        %v397 = vpack.c.bf16 %v388, %v387
        %v398 = vpack.c.bf16 %v390, %v389
        %v399 = vlaneseq
        %v400 = vshrl.u32 %v399, 7
        %v401 = vsub.s32 0, %v400
        %v402 = vrot.slane %v338, %v401
        %vm403 = vcmp.eq.s32.totalorder %v402, %v321
        %vm404 = vcmp.eq.s32.totalorder %v402, %v322
        %vm405 = vcmp.eq.s32.totalorder %v402, %v323
        %vm406 = vcmp.eq.s32.totalorder %v402, %v324
        %vm407 = vcmp.eq.s32.totalorder %v402, %v325
        %vm408 = vcmp.eq.s32.totalorder %v402, %v326
        %vm409 = vcmp.eq.s32.totalorder %v402, %v327
        %vm410 = vcmp.eq.s32.totalorder %v402, %v328
        %vm411 = vcmp.eq.s32.totalorder %v402, %v329
        %vm412 = vcmp.eq.s32.totalorder %v402, %v330
        %vm413 = vcmp.eq.s32.totalorder %v402, %v331
        %vm414 = vcmp.eq.s32.totalorder %v402, %v332
        %vm415 = vcmp.eq.s32.totalorder %v402, %v333
        %vm416 = vcmp.eq.s32.totalorder %v402, %v334
        %vm417 = vcmp.eq.s32.totalorder %v402, %v335
        %vm418 = vcmp.eq.s32.totalorder %v402, %v336
        %v419 = vsel %vm403, 1, 0
        %v420 = vsel %vm404, 1, 0
        %v421 = vsel %vm405, 1, 0
        %v422 = vsel %vm406, 1, 0
        %v423 = vsel %vm407, 1, 0
        %v424 = vsel %vm408, 1, 0
        %v425 = vsel %vm409, 1, 0
        %v426 = vsel %vm410, 1, 0
        %v427 = vsel %vm411, 1, 0
        %v428 = vsel %vm412, 1, 0
        %v429 = vsel %vm413, 1, 0
        %v430 = vsel %vm414, 1, 0
        %v431 = vsel %vm415, 1, 0
        %v432 = vsel %vm416, 1, 0
        %v433 = vsel %vm417, 1, 0
        %v434 = vsel %vm418, 1, 0
        %v435 = vcvt.s32.f32 %v419
        %v436 = vcvt.s32.f32 %v420
        %v437 = vcvt.s32.f32 %v421
        %v438 = vcvt.s32.f32 %v422
        %v439 = vcvt.s32.f32 %v423
        %v440 = vcvt.s32.f32 %v424
        %v441 = vcvt.s32.f32 %v425
        %v442 = vcvt.s32.f32 %v426
        %v443 = vcvt.s32.f32 %v427
        %v444 = vcvt.s32.f32 %v428
        %v445 = vcvt.s32.f32 %v429
        %v446 = vcvt.s32.f32 %v430
        %v447 = vcvt.s32.f32 %v431
        %v448 = vcvt.s32.f32 %v432
        %v449 = vcvt.s32.f32 %v433
        %v450 = vcvt.s32.f32 %v434
        %v451 = vpack.c.bf16 %v436, %v435
        %v452 = vpack.c.bf16 %v438, %v437
        %v453 = vpack.c.bf16 %v440, %v439
        %v454 = vpack.c.bf16 %v442, %v441
        %v455 = vpack.c.bf16 %v444, %v443
        %v456 = vpack.c.bf16 %v446, %v445
        %v457 = vpack.c.bf16 %v448, %v447
        %v458 = vpack.c.bf16 %v450, %v449
        %v459 = vsub.bf16 %v391, %v451
        %v460 = vsub.bf16 %v392, %v452
        %v461 = vsub.bf16 %v393, %v453
        %v462 = vsub.bf16 %v394, %v454
        %v463 = vsub.bf16 %v395, %v455
        %v464 = vsub.bf16 %v396, %v456
        %v465 = vsub.bf16 %v397, %v457
        %v466 = vsub.bf16 %v398, %v458
        %467 = vmatprep.subr.bf16.mxu0 0
        %468 = vmatpush1.bf16.msra.mxu0 %v466
        %469 = vmatprep.subr.bf16.mxu0 0
        %470 = vmatpush1.bf16.msra.mxu0 %v465
        %471 = vmatprep.subr.bf16.mxu0 0
        %472 = vmatpush1.bf16.msra.mxu0 %v464
        %473 = vmatprep.subr.bf16.mxu0 0
        %474 = vmatpush1.bf16.msra.mxu0 %v463
        %475 = vmatprep.subr.bf16.mxu0 0
        %476 = vmatpush1.bf16.msra.mxu0 %v462
        %477 = vmatprep.subr.bf16.mxu0 0
        %478 = vmatpush1.bf16.msra.mxu0 %v461
        %479 = vmatprep.subr.bf16.mxu0 0
        %480 = vmatpush1.bf16.msra.mxu0 %v460
        %481 = vmatprep.subr.bf16.mxu0 0
        %482 = vmatpush1.bf16.msra.mxu0 %v459
        %483 = vmatprep.subr.bf16.mxu0 0
        %484 = vmatpush2.bf16.msra.mxu0 0
        %485 = vmatprep.subr.bf16.mxu0 0
        %486 = vmatpush2.bf16.msra.mxu0 0
        %487 = vmatprep.subr.bf16.mxu0 0
        %488 = vmatpush2.bf16.msra.mxu0 0
        %489 = vmatprep.subr.bf16.mxu0 0
        %490 = vmatpush2.bf16.msra.mxu0 0
        %491 = vmatprep.subr.bf16.mxu0 0
        %492 = vmatpush2.bf16.msra.mxu0 0
        %493 = vmatprep.subr.bf16.mxu0 0
        %494 = vmatpush2.bf16.msra.mxu0 0
        %495 = vmatprep.subr.bf16.mxu0 0
        %496 = vmatpush2.bf16.msra.mxu0 0
        %497 = vmatprep.subr.bf16.mxu0 0
        %498 = vmatpush2.bf16.msra.mxu0 0
        %499 = vmatprep.mubr.bf16.mxu0 0
        %500 = vmatmul.mubr.bf16.gmra.mxu0 %v319
        %v501 = vpop.f32.mrf.mxu0
        %v502 = vadd.f32 0.0, %v501
        %v503 = vpop.f32.mrf.mxu0
        %v504 = vpop.f32.mrf.mxu0
        %v505 = vpop.f32.mrf.mxu0
        %506 = vdwg.mxu0
        %v507 = vld [vmem:[%s309 + $0x1] sm:$0x1]
        %v508 = vld [vmem:[%s316 + $0x1] sm:$0x1]
        %v509 = vlaneseq
        %v510 = vshrl.u32 %v509, 7
        %v511 = vsub.s32 0, %v510
        %v512 = vrot.slane %v507, %v511
        %vm513 = vcmp.eq.s32.totalorder %v512, %v321
        %vm514 = vcmp.eq.s32.totalorder %v512, %v322
        %vm515 = vcmp.eq.s32.totalorder %v512, %v323
        %vm516 = vcmp.eq.s32.totalorder %v512, %v324
        %vm517 = vcmp.eq.s32.totalorder %v512, %v325
        %vm518 = vcmp.eq.s32.totalorder %v512, %v326
        %vm519 = vcmp.eq.s32.totalorder %v512, %v327
        %vm520 = vcmp.eq.s32.totalorder %v512, %v328
        %vm521 = vcmp.eq.s32.totalorder %v512, %v329
        %vm522 = vcmp.eq.s32.totalorder %v512, %v330
        %vm523 = vcmp.eq.s32.totalorder %v512, %v331
        %vm524 = vcmp.eq.s32.totalorder %v512, %v332
        %vm525 = vcmp.eq.s32.totalorder %v512, %v333
        %vm526 = vcmp.eq.s32.totalorder %v512, %v334
        %vm527 = vcmp.eq.s32.totalorder %v512, %v335
        %vm528 = vcmp.eq.s32.totalorder %v512, %v336
        %v529 = vsel %vm513, 1, 0
        %v530 = vsel %vm514, 1, 0
        %v531 = vsel %vm515, 1, 0
        %v532 = vsel %vm516, 1, 0
        %v533 = vsel %vm517, 1, 0
        %v534 = vsel %vm518, 1, 0
        %v535 = vsel %vm519, 1, 0
        %v536 = vsel %vm520, 1, 0
        %v537 = vsel %vm521, 1, 0
        %v538 = vsel %vm522, 1, 0
        %v539 = vsel %vm523, 1, 0
        %v540 = vsel %vm524, 1, 0
        %v541 = vsel %vm525, 1, 0
        %v542 = vsel %vm526, 1, 0
        %v543 = vsel %vm527, 1, 0
        %v544 = vsel %vm528, 1, 0
        %v545 = vcvt.s32.f32 %v529
        %v546 = vcvt.s32.f32 %v530
        %v547 = vcvt.s32.f32 %v531
        %v548 = vcvt.s32.f32 %v532
        %v549 = vcvt.s32.f32 %v533
        %v550 = vcvt.s32.f32 %v534
        %v551 = vcvt.s32.f32 %v535
        %v552 = vcvt.s32.f32 %v536
        %v553 = vcvt.s32.f32 %v537
        %v554 = vcvt.s32.f32 %v538
        %v555 = vcvt.s32.f32 %v539
        %v556 = vcvt.s32.f32 %v540
        %v557 = vcvt.s32.f32 %v541
        %v558 = vcvt.s32.f32 %v542
        %v559 = vcvt.s32.f32 %v543
        %v560 = vcvt.s32.f32 %v544
        %v561 = vpack.c.bf16 %v546, %v545
        %v562 = vpack.c.bf16 %v548, %v547
        %v563 = vpack.c.bf16 %v550, %v549
        %v564 = vpack.c.bf16 %v552, %v551
        %v565 = vpack.c.bf16 %v554, %v553
        %v566 = vpack.c.bf16 %v556, %v555
        %v567 = vpack.c.bf16 %v558, %v557
        %v568 = vpack.c.bf16 %v560, %v559
        %v569 = vlaneseq
        %v570 = vshrl.u32 %v569, 7
        %v571 = vsub.s32 0, %v570
        %v572 = vrot.slane %v508, %v571
        %vm573 = vcmp.eq.s32.totalorder %v572, %v321
        %vm574 = vcmp.eq.s32.totalorder %v572, %v322
        %vm575 = vcmp.eq.s32.totalorder %v572, %v323
        %vm576 = vcmp.eq.s32.totalorder %v572, %v324
        %vm577 = vcmp.eq.s32.totalorder %v572, %v325
        %vm578 = vcmp.eq.s32.totalorder %v572, %v326
        %vm579 = vcmp.eq.s32.totalorder %v572, %v327
        %vm580 = vcmp.eq.s32.totalorder %v572, %v328
        %vm581 = vcmp.eq.s32.totalorder %v572, %v329
        %vm582 = vcmp.eq.s32.totalorder %v572, %v330
        %vm583 = vcmp.eq.s32.totalorder %v572, %v331
        %vm584 = vcmp.eq.s32.totalorder %v572, %v332
        %vm585 = vcmp.eq.s32.totalorder %v572, %v333
        %vm586 = vcmp.eq.s32.totalorder %v572, %v334
        %vm587 = vcmp.eq.s32.totalorder %v572, %v335
        %vm588 = vcmp.eq.s32.totalorder %v572, %v336
        %v589 = vsel %vm573, 1, 0
        %v590 = vsel %vm574, 1, 0
        %v591 = vsel %vm575, 1, 0
        %v592 = vsel %vm576, 1, 0
        %v593 = vsel %vm577, 1, 0
        %v594 = vsel %vm578, 1, 0
        %v595 = vsel %vm579, 1, 0
        %v596 = vsel %vm580, 1, 0
        %v597 = vsel %vm581, 1, 0
        %v598 = vsel %vm582, 1, 0
        %v599 = vsel %vm583, 1, 0
        %v600 = vsel %vm584, 1, 0
        %v601 = vsel %vm585, 1, 0
        %v602 = vsel %vm586, 1, 0
        %v603 = vsel %vm587, 1, 0
        %v604 = vsel %vm588, 1, 0
        %v605 = vcvt.s32.f32 %v589
        %v606 = vcvt.s32.f32 %v590
        %v607 = vcvt.s32.f32 %v591
        %v608 = vcvt.s32.f32 %v592
        %v609 = vcvt.s32.f32 %v593
        %v610 = vcvt.s32.f32 %v594
        %v611 = vcvt.s32.f32 %v595
        %v612 = vcvt.s32.f32 %v596
        %v613 = vcvt.s32.f32 %v597
        %v614 = vcvt.s32.f32 %v598
        %v615 = vcvt.s32.f32 %v599
        %v616 = vcvt.s32.f32 %v600
        %v617 = vcvt.s32.f32 %v601
        %v618 = vcvt.s32.f32 %v602
        %v619 = vcvt.s32.f32 %v603
        %v620 = vcvt.s32.f32 %v604
        %v621 = vpack.c.bf16 %v606, %v605
        %v622 = vpack.c.bf16 %v608, %v607
        %v623 = vpack.c.bf16 %v610, %v609
        %v624 = vpack.c.bf16 %v612, %v611
        %v625 = vpack.c.bf16 %v614, %v613
        %v626 = vpack.c.bf16 %v616, %v615
        %v627 = vpack.c.bf16 %v618, %v617
        %v628 = vpack.c.bf16 %v620, %v619
        %v629 = vsub.bf16 %v561, %v621
        %v630 = vsub.bf16 %v562, %v622
        %v631 = vsub.bf16 %v563, %v623
        %v632 = vsub.bf16 %v564, %v624
        %v633 = vsub.bf16 %v565, %v625
        %v634 = vsub.bf16 %v566, %v626
        %v635 = vsub.bf16 %v567, %v627
        %v636 = vsub.bf16 %v568, %v628
        %637 = vmatprep.subr.bf16.mxu0 0
        %638 = vmatpush1.bf16.msra.mxu0 %v636
        %639 = vmatprep.subr.bf16.mxu0 0
        %640 = vmatpush1.bf16.msra.mxu0 %v635
        %641 = vmatprep.subr.bf16.mxu0 0
        %642 = vmatpush1.bf16.msra.mxu0 %v634
        %643 = vmatprep.subr.bf16.mxu0 0
        %644 = vmatpush1.bf16.msra.mxu0 %v633
        %645 = vmatprep.subr.bf16.mxu0 0
        %646 = vmatpush1.bf16.msra.mxu0 %v632
        %647 = vmatprep.subr.bf16.mxu0 0
        %648 = vmatpush1.bf16.msra.mxu0 %v631
        %649 = vmatprep.subr.bf16.mxu0 0
        %650 = vmatpush1.bf16.msra.mxu0 %v630
        %651 = vmatprep.subr.bf16.mxu0 0
        %652 = vmatpush1.bf16.msra.mxu0 %v629
        %653 = vmatprep.subr.bf16.mxu0 0
        %654 = vmatpush2.bf16.msra.mxu0 0
        %655 = vmatprep.subr.bf16.mxu0 0
        %656 = vmatpush2.bf16.msra.mxu0 0
        %657 = vmatprep.subr.bf16.mxu0 0
        %658 = vmatpush2.bf16.msra.mxu0 0
        %659 = vmatprep.subr.bf16.mxu0 0
        %660 = vmatpush2.bf16.msra.mxu0 0
        %661 = vmatprep.subr.bf16.mxu0 0
        %662 = vmatpush2.bf16.msra.mxu0 0
        %663 = vmatprep.subr.bf16.mxu0 0
        %664 = vmatpush2.bf16.msra.mxu0 0
        %665 = vmatprep.subr.bf16.mxu0 0
        %666 = vmatpush2.bf16.msra.mxu0 0
        %667 = vmatprep.subr.bf16.mxu0 0
        %668 = vmatpush2.bf16.msra.mxu0 0
        %669 = vmatprep.mubr.bf16.mxu0 0
        %670 = vmatmul.mubr.bf16.gmra.mxu0 %v319
        %v671 = vpop.f32.mrf.mxu0
        %v672 = vadd.f32 0.0, %v671
        %v673 = vpop.f32.mrf.mxu0
        %v674 = vpop.f32.mrf.mxu0
        %v675 = vpop.f32.mrf.mxu0
        %676 = vdwg.mxu0
        %v677 = vmax.f32 %v502, %v672
        %v678 = vld [vmem:[%s309 + $0x2] sm:$0x1]
        %v679 = vld [vmem:[%s316 + $0x2] sm:$0x1]
        %v680 = vlaneseq
        %v681 = vshrl.u32 %v680, 7
        %v682 = vsub.s32 0, %v681
        %v683 = vrot.slane %v678, %v682
        %vm684 = vcmp.eq.s32.totalorder %v683, %v321
        %vm685 = vcmp.eq.s32.totalorder %v683, %v322
        %vm686 = vcmp.eq.s32.totalorder %v683, %v323
        %vm687 = vcmp.eq.s32.totalorder %v683, %v324
        %vm688 = vcmp.eq.s32.totalorder %v683, %v325
        %vm689 = vcmp.eq.s32.totalorder %v683, %v326
        %vm690 = vcmp.eq.s32.totalorder %v683, %v327
        %vm691 = vcmp.eq.s32.totalorder %v683, %v328
        %vm692 = vcmp.eq.s32.totalorder %v683, %v329
        %vm693 = vcmp.eq.s32.totalorder %v683, %v330
        %vm694 = vcmp.eq.s32.totalorder %v683, %v331
        %vm695 = vcmp.eq.s32.totalorder %v683, %v332
        %vm696 = vcmp.eq.s32.totalorder %v683, %v333
        %vm697 = vcmp.eq.s32.totalorder %v683, %v334
        %vm698 = vcmp.eq.s32.totalorder %v683, %v335
        %vm699 = vcmp.eq.s32.totalorder %v683, %v336
        %v700 = vsel %vm684, 1, 0
        %v701 = vsel %vm685, 1, 0
        %v702 = vsel %vm686, 1, 0
        %v703 = vsel %vm687, 1, 0
        %v704 = vsel %vm688, 1, 0
        %v705 = vsel %vm689, 1, 0
        %v706 = vsel %vm690, 1, 0
        %v707 = vsel %vm691, 1, 0
        %v708 = vsel %vm692, 1, 0
        %v709 = vsel %vm693, 1, 0
        %v710 = vsel %vm694, 1, 0
        %v711 = vsel %vm695, 1, 0
        %v712 = vsel %vm696, 1, 0
        %v713 = vsel %vm697, 1, 0
        %v714 = vsel %vm698, 1, 0
        %v715 = vsel %vm699, 1, 0
        %v716 = vcvt.s32.f32 %v700
        %v717 = vcvt.s32.f32 %v701
        %v718 = vcvt.s32.f32 %v702
        %v719 = vcvt.s32.f32 %v703
        %v720 = vcvt.s32.f32 %v704
        %v721 = vcvt.s32.f32 %v705
        %v722 = vcvt.s32.f32 %v706
        %v723 = vcvt.s32.f32 %v707
        %v724 = vcvt.s32.f32 %v708
        %v725 = vcvt.s32.f32 %v709
        %v726 = vcvt.s32.f32 %v710
        %v727 = vcvt.s32.f32 %v711
        %v728 = vcvt.s32.f32 %v712
        %v729 = vcvt.s32.f32 %v713
        %v730 = vcvt.s32.f32 %v714
        %v731 = vcvt.s32.f32 %v715
        %v732 = vpack.c.bf16 %v717, %v716
        %v733 = vpack.c.bf16 %v719, %v718
        %v734 = vpack.c.bf16 %v721, %v720
        %v735 = vpack.c.bf16 %v723, %v722
        %v736 = vpack.c.bf16 %v725, %v724
        %v737 = vpack.c.bf16 %v727, %v726
        %v738 = vpack.c.bf16 %v729, %v728
        %v739 = vpack.c.bf16 %v731, %v730
        %v740 = vlaneseq
        %v741 = vshrl.u32 %v740, 7
        %v742 = vsub.s32 0, %v741
        %v743 = vrot.slane %v679, %v742
        %vm744 = vcmp.eq.s32.totalorder %v743, %v321
        %vm745 = vcmp.eq.s32.totalorder %v743, %v322
        %vm746 = vcmp.eq.s32.totalorder %v743, %v323
        %vm747 = vcmp.eq.s32.totalorder %v743, %v324
        %vm748 = vcmp.eq.s32.totalorder %v743, %v325
        %vm749 = vcmp.eq.s32.totalorder %v743, %v326
        %vm750 = vcmp.eq.s32.totalorder %v743, %v327
        %vm751 = vcmp.eq.s32.totalorder %v743, %v328
        %vm752 = vcmp.eq.s32.totalorder %v743, %v329
        %vm753 = vcmp.eq.s32.totalorder %v743, %v330
        %vm754 = vcmp.eq.s32.totalorder %v743, %v331
        %vm755 = vcmp.eq.s32.totalorder %v743, %v332
        %vm756 = vcmp.eq.s32.totalorder %v743, %v333
        %vm757 = vcmp.eq.s32.totalorder %v743, %v334
        %vm758 = vcmp.eq.s32.totalorder %v743, %v335
        %vm759 = vcmp.eq.s32.totalorder %v743, %v336
        %v760 = vsel %vm744, 1, 0
        %v761 = vsel %vm745, 1, 0
        %v762 = vsel %vm746, 1, 0
        %v763 = vsel %vm747, 1, 0
        %v764 = vsel %vm748, 1, 0
        %v765 = vsel %vm749, 1, 0
        %v766 = vsel %vm750, 1, 0
        %v767 = vsel %vm751, 1, 0
        %v768 = vsel %vm752, 1, 0
        %v769 = vsel %vm753, 1, 0
        %v770 = vsel %vm754, 1, 0
        %v771 = vsel %vm755, 1, 0
        %v772 = vsel %vm756, 1, 0
        %v773 = vsel %vm757, 1, 0
        %v774 = vsel %vm758, 1, 0
        %v775 = vsel %vm759, 1, 0
        %v776 = vcvt.s32.f32 %v760
        %v777 = vcvt.s32.f32 %v761
        %v778 = vcvt.s32.f32 %v762
        %v779 = vcvt.s32.f32 %v763
        %v780 = vcvt.s32.f32 %v764
        %v781 = vcvt.s32.f32 %v765
        %v782 = vcvt.s32.f32 %v766
        %v783 = vcvt.s32.f32 %v767
        %v784 = vcvt.s32.f32 %v768
        %v785 = vcvt.s32.f32 %v769
        %v786 = vcvt.s32.f32 %v770
        %v787 = vcvt.s32.f32 %v771
        %v788 = vcvt.s32.f32 %v772
        %v789 = vcvt.s32.f32 %v773
        %v790 = vcvt.s32.f32 %v774
        %v791 = vcvt.s32.f32 %v775
        %v792 = vpack.c.bf16 %v777, %v776
        %v793 = vpack.c.bf16 %v779, %v778
        %v794 = vpack.c.bf16 %v781, %v780
        %v795 = vpack.c.bf16 %v783, %v782
        %v796 = vpack.c.bf16 %v785, %v784
        %v797 = vpack.c.bf16 %v787, %v786
        %v798 = vpack.c.bf16 %v789, %v788
        %v799 = vpack.c.bf16 %v791, %v790
        %v800 = vsub.bf16 %v732, %v792
        %v801 = vsub.bf16 %v733, %v793
        %v802 = vsub.bf16 %v734, %v794
        %v803 = vsub.bf16 %v735, %v795
        %v804 = vsub.bf16 %v736, %v796
        %v805 = vsub.bf16 %v737, %v797
        %v806 = vsub.bf16 %v738, %v798
        %v807 = vsub.bf16 %v739, %v799
        %808 = vmatprep.subr.bf16.mxu0 0
        %809 = vmatpush1.bf16.msra.mxu0 %v807
        %810 = vmatprep.subr.bf16.mxu0 0
        %811 = vmatpush1.bf16.msra.mxu0 %v806
        %812 = vmatprep.subr.bf16.mxu0 0
        %813 = vmatpush1.bf16.msra.mxu0 %v805
        %814 = vmatprep.subr.bf16.mxu0 0
        %815 = vmatpush1.bf16.msra.mxu0 %v804
        %816 = vmatprep.subr.bf16.mxu0 0
        %817 = vmatpush1.bf16.msra.mxu0 %v803
        %818 = vmatprep.subr.bf16.mxu0 0
        %819 = vmatpush1.bf16.msra.mxu0 %v802
        %820 = vmatprep.subr.bf16.mxu0 0
        %821 = vmatpush1.bf16.msra.mxu0 %v801
        %822 = vmatprep.subr.bf16.mxu0 0
        %823 = vmatpush1.bf16.msra.mxu0 %v800
        %824 = vmatprep.subr.bf16.mxu0 0
        %825 = vmatpush2.bf16.msra.mxu0 0
        %826 = vmatprep.subr.bf16.mxu0 0
        %827 = vmatpush2.bf16.msra.mxu0 0
        %828 = vmatprep.subr.bf16.mxu0 0
        %829 = vmatpush2.bf16.msra.mxu0 0
        %830 = vmatprep.subr.bf16.mxu0 0
        %831 = vmatpush2.bf16.msra.mxu0 0
        %832 = vmatprep.subr.bf16.mxu0 0
        %833 = vmatpush2.bf16.msra.mxu0 0
        %834 = vmatprep.subr.bf16.mxu0 0
        %835 = vmatpush2.bf16.msra.mxu0 0
        %836 = vmatprep.subr.bf16.mxu0 0
        %837 = vmatpush2.bf16.msra.mxu0 0
        %838 = vmatprep.subr.bf16.mxu0 0
        %839 = vmatpush2.bf16.msra.mxu0 0
        %840 = vmatprep.mubr.bf16.mxu0 0
        %841 = vmatmul.mubr.bf16.gmra.mxu0 %v319
        %v842 = vpop.f32.mrf.mxu0
        %v843 = vadd.f32 0.0, %v842
        %v844 = vpop.f32.mrf.mxu0
        %v845 = vpop.f32.mrf.mxu0
        %v846 = vpop.f32.mrf.mxu0
        %847 = vdwg.mxu0
        %v848 = vmax.f32 %v677, %v843
        %v849 = vld [vmem:[%s309 + $0x3] sm:$0x1]
        %v850 = vld [vmem:[%s316 + $0x3] sm:$0x1]
        %v851 = vlaneseq
        %v852 = vshrl.u32 %v851, 7
        %v853 = vsub.s32 0, %v852
        %v854 = vrot.slane %v849, %v853
        %vm855 = vcmp.eq.s32.totalorder %v854, %v321
        %vm856 = vcmp.eq.s32.totalorder %v854, %v322
        %vm857 = vcmp.eq.s32.totalorder %v854, %v323
        %vm858 = vcmp.eq.s32.totalorder %v854, %v324
        %vm859 = vcmp.eq.s32.totalorder %v854, %v325
        %vm860 = vcmp.eq.s32.totalorder %v854, %v326
        %vm861 = vcmp.eq.s32.totalorder %v854, %v327
        %vm862 = vcmp.eq.s32.totalorder %v854, %v328
        %vm863 = vcmp.eq.s32.totalorder %v854, %v329
        %vm864 = vcmp.eq.s32.totalorder %v854, %v330
        %vm865 = vcmp.eq.s32.totalorder %v854, %v331
        %vm866 = vcmp.eq.s32.totalorder %v854, %v332
        %vm867 = vcmp.eq.s32.totalorder %v854, %v333
        %vm868 = vcmp.eq.s32.totalorder %v854, %v334
        %vm869 = vcmp.eq.s32.totalorder %v854, %v335
        %vm870 = vcmp.eq.s32.totalorder %v854, %v336
        %v871 = vsel %vm855, 1, 0
        %v872 = vsel %vm856, 1, 0
        %v873 = vsel %vm857, 1, 0
        %v874 = vsel %vm858, 1, 0
        %v875 = vsel %vm859, 1, 0
        %v876 = vsel %vm860, 1, 0
        %v877 = vsel %vm861, 1, 0
        %v878 = vsel %vm862, 1, 0
        %v879 = vsel %vm863, 1, 0
        %v880 = vsel %vm864, 1, 0
        %v881 = vsel %vm865, 1, 0
        %v882 = vsel %vm866, 1, 0
        %v883 = vsel %vm867, 1, 0
        %v884 = vsel %vm868, 1, 0
        %v885 = vsel %vm869, 1, 0
        %v886 = vsel %vm870, 1, 0
        %v887 = vcvt.s32.f32 %v871
        %v888 = vcvt.s32.f32 %v872
        %v889 = vcvt.s32.f32 %v873
        %v890 = vcvt.s32.f32 %v874
        %v891 = vcvt.s32.f32 %v875
        %v892 = vcvt.s32.f32 %v876
        %v893 = vcvt.s32.f32 %v877
        %v894 = vcvt.s32.f32 %v878
        %v895 = vcvt.s32.f32 %v879
        %v896 = vcvt.s32.f32 %v880
        %v897 = vcvt.s32.f32 %v881
        %v898 = vcvt.s32.f32 %v882
        %v899 = vcvt.s32.f32 %v883
        %v900 = vcvt.s32.f32 %v884
        %v901 = vcvt.s32.f32 %v885
        %v902 = vcvt.s32.f32 %v886
        %v903 = vpack.c.bf16 %v888, %v887
        %v904 = vpack.c.bf16 %v890, %v889
        %v905 = vpack.c.bf16 %v892, %v891
        %v906 = vpack.c.bf16 %v894, %v893
        %v907 = vpack.c.bf16 %v896, %v895
        %v908 = vpack.c.bf16 %v898, %v897
        %v909 = vpack.c.bf16 %v900, %v899
        %v910 = vpack.c.bf16 %v902, %v901
        %v911 = vlaneseq
        %v912 = vshrl.u32 %v911, 7
        %v913 = vsub.s32 0, %v912
        %v914 = vrot.slane %v850, %v913
        %vm915 = vcmp.eq.s32.totalorder %v914, %v321
        %vm916 = vcmp.eq.s32.totalorder %v914, %v322
        %vm917 = vcmp.eq.s32.totalorder %v914, %v323
        %vm918 = vcmp.eq.s32.totalorder %v914, %v324
        %vm919 = vcmp.eq.s32.totalorder %v914, %v325
        %vm920 = vcmp.eq.s32.totalorder %v914, %v326
        %vm921 = vcmp.eq.s32.totalorder %v914, %v327
        %vm922 = vcmp.eq.s32.totalorder %v914, %v328
        %vm923 = vcmp.eq.s32.totalorder %v914, %v329
        %vm924 = vcmp.eq.s32.totalorder %v914, %v330
        %vm925 = vcmp.eq.s32.totalorder %v914, %v331
        %vm926 = vcmp.eq.s32.totalorder %v914, %v332
        %vm927 = vcmp.eq.s32.totalorder %v914, %v333
        %vm928 = vcmp.eq.s32.totalorder %v914, %v334
        %vm929 = vcmp.eq.s32.totalorder %v914, %v335
        %vm930 = vcmp.eq.s32.totalorder %v914, %v336
        %v931 = vsel %vm915, 1, 0
        %v932 = vsel %vm916, 1, 0
        %v933 = vsel %vm917, 1, 0
        %v934 = vsel %vm918, 1, 0
        %v935 = vsel %vm919, 1, 0
        %v936 = vsel %vm920, 1, 0
        %v937 = vsel %vm921, 1, 0
        %v938 = vsel %vm922, 1, 0
        %v939 = vsel %vm923, 1, 0
        %v940 = vsel %vm924, 1, 0
        %v941 = vsel %vm925, 1, 0
        %v942 = vsel %vm926, 1, 0
        %v943 = vsel %vm927, 1, 0
        %v944 = vsel %vm928, 1, 0
        %v945 = vsel %vm929, 1, 0
        %v946 = vsel %vm930, 1, 0
        %v947 = vcvt.s32.f32 %v931
        %v948 = vcvt.s32.f32 %v932
        %v949 = vcvt.s32.f32 %v933
        %v950 = vcvt.s32.f32 %v934
        %v951 = vcvt.s32.f32 %v935
        %v952 = vcvt.s32.f32 %v936
        %v953 = vcvt.s32.f32 %v937
        %v954 = vcvt.s32.f32 %v938
        %v955 = vcvt.s32.f32 %v939
        %v956 = vcvt.s32.f32 %v940
        %v957 = vcvt.s32.f32 %v941
        %v958 = vcvt.s32.f32 %v942
        %v959 = vcvt.s32.f32 %v943
        %v960 = vcvt.s32.f32 %v944
        %v961 = vcvt.s32.f32 %v945
        %v962 = vcvt.s32.f32 %v946
        %v963 = vpack.c.bf16 %v948, %v947
        %v964 = vpack.c.bf16 %v950, %v949
        %v965 = vpack.c.bf16 %v952, %v951
        %v966 = vpack.c.bf16 %v954, %v953
        %v967 = vpack.c.bf16 %v956, %v955
        %v968 = vpack.c.bf16 %v958, %v957
        %v969 = vpack.c.bf16 %v960, %v959
        %v970 = vpack.c.bf16 %v962, %v961
        %v971 = vsub.bf16 %v903, %v963
        %v972 = vsub.bf16 %v904, %v964
        %v973 = vsub.bf16 %v905, %v965
        %v974 = vsub.bf16 %v906, %v966
        %v975 = vsub.bf16 %v907, %v967
        %v976 = vsub.bf16 %v908, %v968
        %v977 = vsub.bf16 %v909, %v969
        %v978 = vsub.bf16 %v910, %v970
        %979 = vmatprep.subr.bf16.mxu0 0
        %980 = vmatpush1.bf16.msra.mxu0 %v978
        %981 = vmatprep.subr.bf16.mxu0 0
        %982 = vmatpush1.bf16.msra.mxu0 %v977
        %983 = vmatprep.subr.bf16.mxu0 0
        %984 = vmatpush1.bf16.msra.mxu0 %v976
        %985 = vmatprep.subr.bf16.mxu0 0
        %986 = vmatpush1.bf16.msra.mxu0 %v975
        %987 = vmatprep.subr.bf16.mxu0 0
        %988 = vmatpush1.bf16.msra.mxu0 %v974
        %989 = vmatprep.subr.bf16.mxu0 0
        %990 = vmatpush1.bf16.msra.mxu0 %v973
        %991 = vmatprep.subr.bf16.mxu0 0
        %992 = vmatpush1.bf16.msra.mxu0 %v972
        %993 = vmatprep.subr.bf16.mxu0 0
        %994 = vmatpush1.bf16.msra.mxu0 %v971
        %995 = vmatprep.subr.bf16.mxu0 0
        %996 = vmatpush2.bf16.msra.mxu0 0
        %997 = vmatprep.subr.bf16.mxu0 0
        %998 = vmatpush2.bf16.msra.mxu0 0
        %999 = vmatprep.subr.bf16.mxu0 0
        %1000 = vmatpush2.bf16.msra.mxu0 0
        %1001 = vmatprep.subr.bf16.mxu0 0
        %1002 = vmatpush2.bf16.msra.mxu0 0
        %1003 = vmatprep.subr.bf16.mxu0 0
        %1004 = vmatpush2.bf16.msra.mxu0 0
        %1005 = vmatprep.subr.bf16.mxu0 0
        %1006 = vmatpush2.bf16.msra.mxu0 0
        %1007 = vmatprep.subr.bf16.mxu0 0
        %1008 = vmatpush2.bf16.msra.mxu0 0
        %1009 = vmatprep.subr.bf16.mxu0 0
        %1010 = vmatpush2.bf16.msra.mxu0 0
        %1011 = vmatprep.mubr.bf16.mxu0 0
        %1012 = vmatmul.mubr.bf16.gmra.mxu0 %v319
        %v1013 = vpop.f32.mrf.mxu0
        %v1014 = vadd.f32 0.0, %v1013
        %v1015 = vpop.f32.mrf.mxu0
        %v1016 = vpop.f32.mrf.mxu0
        %v1017 = vpop.f32.mrf.mxu0
        %1018 = vdwg.mxu0
        %v1019 = vmax.f32 %v848, %v1014
        %v1020 = vld [vmem:[%s309 + $0x4] sm:$0x1]
        %v1021 = vld [vmem:[%s316 + $0x4] sm:$0x1]
        %v1022 = vlaneseq
        %v1023 = vshrl.u32 %v1022, 7
        %v1024 = vsub.s32 0, %v1023
        %v1025 = vrot.slane %v1020, %v1024
        %vm1026 = vcmp.eq.s32.totalorder %v1025, %v321
        %vm1027 = vcmp.eq.s32.totalorder %v1025, %v322
        %vm1028 = vcmp.eq.s32.totalorder %v1025, %v323
        %vm1029 = vcmp.eq.s32.totalorder %v1025, %v324
        %vm1030 = vcmp.eq.s32.totalorder %v1025, %v325
        %vm1031 = vcmp.eq.s32.totalorder %v1025, %v326
        %vm1032 = vcmp.eq.s32.totalorder %v1025, %v327
        %vm1033 = vcmp.eq.s32.totalorder %v1025, %v328
        %vm1034 = vcmp.eq.s32.totalorder %v1025, %v329
        %vm1035 = vcmp.eq.s32.totalorder %v1025, %v330
        %vm1036 = vcmp.eq.s32.totalorder %v1025, %v331
        %vm1037 = vcmp.eq.s32.totalorder %v1025, %v332
        %vm1038 = vcmp.eq.s32.totalorder %v1025, %v333
        %vm1039 = vcmp.eq.s32.totalorder %v1025, %v334
        %vm1040 = vcmp.eq.s32.totalorder %v1025, %v335
        %vm1041 = vcmp.eq.s32.totalorder %v1025, %v336
        %v1042 = vsel %vm1026, 1, 0
        %v1043 = vsel %vm1027, 1, 0
        %v1044 = vsel %vm1028, 1, 0
        %v1045 = vsel %vm1029, 1, 0
        %v1046 = vsel %vm1030, 1, 0
        %v1047 = vsel %vm1031, 1, 0
        %v1048 = vsel %vm1032, 1, 0
        %v1049 = vsel %vm1033, 1, 0
        %v1050 = vsel %vm1034, 1, 0
        %v1051 = vsel %vm1035, 1, 0
        %v1052 = vsel %vm1036, 1, 0
        %v1053 = vsel %vm1037, 1, 0
        %v1054 = vsel %vm1038, 1, 0
        %v1055 = vsel %vm1039, 1, 0
        %v1056 = vsel %vm1040, 1, 0
        %v1057 = vsel %vm1041, 1, 0
        %v1058 = vcvt.s32.f32 %v1042
        %v1059 = vcvt.s32.f32 %v1043
        %v1060 = vcvt.s32.f32 %v1044
        %v1061 = vcvt.s32.f32 %v1045
        %v1062 = vcvt.s32.f32 %v1046
        %v1063 = vcvt.s32.f32 %v1047
        %v1064 = vcvt.s32.f32 %v1048
        %v1065 = vcvt.s32.f32 %v1049
        %v1066 = vcvt.s32.f32 %v1050
        %v1067 = vcvt.s32.f32 %v1051
        %v1068 = vcvt.s32.f32 %v1052
        %v1069 = vcvt.s32.f32 %v1053
        %v1070 = vcvt.s32.f32 %v1054
        %v1071 = vcvt.s32.f32 %v1055
        %v1072 = vcvt.s32.f32 %v1056
        %v1073 = vcvt.s32.f32 %v1057
        %v1074 = vpack.c.bf16 %v1059, %v1058
        %v1075 = vpack.c.bf16 %v1061, %v1060
        %v1076 = vpack.c.bf16 %v1063, %v1062
        %v1077 = vpack.c.bf16 %v1065, %v1064
        %v1078 = vpack.c.bf16 %v1067, %v1066
        %v1079 = vpack.c.bf16 %v1069, %v1068
        %v1080 = vpack.c.bf16 %v1071, %v1070
        %v1081 = vpack.c.bf16 %v1073, %v1072
        %v1082 = vlaneseq
        %v1083 = vshrl.u32 %v1082, 7
        %v1084 = vsub.s32 0, %v1083
        %v1085 = vrot.slane %v1021, %v1084
        %vm1086 = vcmp.eq.s32.totalorder %v1085, %v321
        %vm1087 = vcmp.eq.s32.totalorder %v1085, %v322
        %vm1088 = vcmp.eq.s32.totalorder %v1085, %v323
        %vm1089 = vcmp.eq.s32.totalorder %v1085, %v324
        %vm1090 = vcmp.eq.s32.totalorder %v1085, %v325
        %vm1091 = vcmp.eq.s32.totalorder %v1085, %v326
        %vm1092 = vcmp.eq.s32.totalorder %v1085, %v327
        %vm1093 = vcmp.eq.s32.totalorder %v1085, %v328
        %vm1094 = vcmp.eq.s32.totalorder %v1085, %v329
        %vm1095 = vcmp.eq.s32.totalorder %v1085, %v330
        %vm1096 = vcmp.eq.s32.totalorder %v1085, %v331
        %vm1097 = vcmp.eq.s32.totalorder %v1085, %v332
        %vm1098 = vcmp.eq.s32.totalorder %v1085, %v333
        %vm1099 = vcmp.eq.s32.totalorder %v1085, %v334
        %vm1100 = vcmp.eq.s32.totalorder %v1085, %v335
        %vm1101 = vcmp.eq.s32.totalorder %v1085, %v336
        %v1102 = vsel %vm1086, 1, 0
        %v1103 = vsel %vm1087, 1, 0
        %v1104 = vsel %vm1088, 1, 0
        %v1105 = vsel %vm1089, 1, 0
        %v1106 = vsel %vm1090, 1, 0
        %v1107 = vsel %vm1091, 1, 0
        %v1108 = vsel %vm1092, 1, 0
        %v1109 = vsel %vm1093, 1, 0
        %v1110 = vsel %vm1094, 1, 0
        %v1111 = vsel %vm1095, 1, 0
        %v1112 = vsel %vm1096, 1, 0
        %v1113 = vsel %vm1097, 1, 0
        %v1114 = vsel %vm1098, 1, 0
        %v1115 = vsel %vm1099, 1, 0
        %v1116 = vsel %vm1100, 1, 0
        %v1117 = vsel %vm1101, 1, 0
        %v1118 = vcvt.s32.f32 %v1102
        %v1119 = vcvt.s32.f32 %v1103
        %v1120 = vcvt.s32.f32 %v1104
        %v1121 = vcvt.s32.f32 %v1105
        %v1122 = vcvt.s32.f32 %v1106
        %v1123 = vcvt.s32.f32 %v1107
        %v1124 = vcvt.s32.f32 %v1108
        %v1125 = vcvt.s32.f32 %v1109
        %v1126 = vcvt.s32.f32 %v1110
        %v1127 = vcvt.s32.f32 %v1111
        %v1128 = vcvt.s32.f32 %v1112
        %v1129 = vcvt.s32.f32 %v1113
        %v1130 = vcvt.s32.f32 %v1114
        %v1131 = vcvt.s32.f32 %v1115
        %v1132 = vcvt.s32.f32 %v1116
        %v1133 = vcvt.s32.f32 %v1117
        %v1134 = vpack.c.bf16 %v1119, %v1118
        %v1135 = vpack.c.bf16 %v1121, %v1120
        %v1136 = vpack.c.bf16 %v1123, %v1122
        %v1137 = vpack.c.bf16 %v1125, %v1124
        %v1138 = vpack.c.bf16 %v1127, %v1126
        %v1139 = vpack.c.bf16 %v1129, %v1128
        %v1140 = vpack.c.bf16 %v1131, %v1130
        %v1141 = vpack.c.bf16 %v1133, %v1132
        %v1142 = vsub.bf16 %v1074, %v1134
        %v1143 = vsub.bf16 %v1075, %v1135
        %v1144 = vsub.bf16 %v1076, %v1136
        %v1145 = vsub.bf16 %v1077, %v1137
        %v1146 = vsub.bf16 %v1078, %v1138
        %v1147 = vsub.bf16 %v1079, %v1139
        %v1148 = vsub.bf16 %v1080, %v1140
        %v1149 = vsub.bf16 %v1081, %v1141
        %1150 = vmatprep.subr.bf16.mxu0 0
        %1151 = vmatpush1.bf16.msra.mxu0 %v1149
        %1152 = vmatprep.subr.bf16.mxu0 0
        %1153 = vmatpush1.bf16.msra.mxu0 %v1148
        %1154 = vmatprep.subr.bf16.mxu0 0
        %1155 = vmatpush1.bf16.msra.mxu0 %v1147
        %1156 = vmatprep.subr.bf16.mxu0 0
        %1157 = vmatpush1.bf16.msra.mxu0 %v1146
        %1158 = vmatprep.subr.bf16.mxu0 0
        %1159 = vmatpush1.bf16.msra.mxu0 %v1145
        %1160 = vmatprep.subr.bf16.mxu0 0
        %1161 = vmatpush1.bf16.msra.mxu0 %v1144
        %1162 = vmatprep.subr.bf16.mxu0 0
        %1163 = vmatpush1.bf16.msra.mxu0 %v1143
        %1164 = vmatprep.subr.bf16.mxu0 0
        %1165 = vmatpush1.bf16.msra.mxu0 %v1142
        %1166 = vmatprep.subr.bf16.mxu0 0
        %1167 = vmatpush2.bf16.msra.mxu0 0
        %1168 = vmatprep.subr.bf16.mxu0 0
        %1169 = vmatpush2.bf16.msra.mxu0 0
        %1170 = vmatprep.subr.bf16.mxu0 0
        %1171 = vmatpush2.bf16.msra.mxu0 0
        %1172 = vmatprep.subr.bf16.mxu0 0
        %1173 = vmatpush2.bf16.msra.mxu0 0
        %1174 = vmatprep.subr.bf16.mxu0 0
        %1175 = vmatpush2.bf16.msra.mxu0 0
        %1176 = vmatprep.subr.bf16.mxu0 0
        %1177 = vmatpush2.bf16.msra.mxu0 0
        %1178 = vmatprep.subr.bf16.mxu0 0
        %1179 = vmatpush2.bf16.msra.mxu0 0
        %1180 = vmatprep.subr.bf16.mxu0 0
        %1181 = vmatpush2.bf16.msra.mxu0 0
        %1182 = vmatprep.mubr.bf16.mxu0 0
        %1183 = vmatmul.mubr.bf16.gmra.mxu0 %v319
        %v1184 = vpop.f32.mrf.mxu0
        %v1185 = vadd.f32 0.0, %v1184
        %v1186 = vpop.f32.mrf.mxu0
        %v1187 = vpop.f32.mrf.mxu0
        %v1188 = vpop.f32.mrf.mxu0
        %1189 = vdwg.mxu0
        %v1190 = vmax.f32 %v1019, %v1185
        %v1191 = vld [vmem:[%s309 + $0x5] sm:$0x1]
        %v1192 = vld [vmem:[%s316 + $0x5] sm:$0x1]
        %v1193 = vlaneseq
        %v1194 = vshrl.u32 %v1193, 7
        %v1195 = vsub.s32 0, %v1194
        %v1196 = vrot.slane %v1191, %v1195
        %vm1197 = vcmp.eq.s32.totalorder %v1196, %v321
        %vm1198 = vcmp.eq.s32.totalorder %v1196, %v322
        %vm1199 = vcmp.eq.s32.totalorder %v1196, %v323
        %vm1200 = vcmp.eq.s32.totalorder %v1196, %v324
        %vm1201 = vcmp.eq.s32.totalorder %v1196, %v325
        %vm1202 = vcmp.eq.s32.totalorder %v1196, %v326
        %vm1203 = vcmp.eq.s32.totalorder %v1196, %v327
        %vm1204 = vcmp.eq.s32.totalorder %v1196, %v328
        %vm1205 = vcmp.eq.s32.totalorder %v1196, %v329
        %vm1206 = vcmp.eq.s32.totalorder %v1196, %v330
        %vm1207 = vcmp.eq.s32.totalorder %v1196, %v331
        %vm1208 = vcmp.eq.s32.totalorder %v1196, %v332
        %vm1209 = vcmp.eq.s32.totalorder %v1196, %v333
        %vm1210 = vcmp.eq.s32.totalorder %v1196, %v334
        %vm1211 = vcmp.eq.s32.totalorder %v1196, %v335
        %vm1212 = vcmp.eq.s32.totalorder %v1196, %v336
        %v1213 = vsel %vm1197, 1, 0
        %v1214 = vsel %vm1198, 1, 0
        %v1215 = vsel %vm1199, 1, 0
        %v1216 = vsel %vm1200, 1, 0
        %v1217 = vsel %vm1201, 1, 0
        %v1218 = vsel %vm1202, 1, 0
        %v1219 = vsel %vm1203, 1, 0
        %v1220 = vsel %vm1204, 1, 0
        %v1221 = vsel %vm1205, 1, 0
        %v1222 = vsel %vm1206, 1, 0
        %v1223 = vsel %vm1207, 1, 0
        %v1224 = vsel %vm1208, 1, 0
        %v1225 = vsel %vm1209, 1, 0
        %v1226 = vsel %vm1210, 1, 0
        %v1227 = vsel %vm1211, 1, 0
        %v1228 = vsel %vm1212, 1, 0
        %v1229 = vcvt.s32.f32 %v1213
        %v1230 = vcvt.s32.f32 %v1214
        %v1231 = vcvt.s32.f32 %v1215
        %v1232 = vcvt.s32.f32 %v1216
        %v1233 = vcvt.s32.f32 %v1217
        %v1234 = vcvt.s32.f32 %v1218
        %v1235 = vcvt.s32.f32 %v1219
        %v1236 = vcvt.s32.f32 %v1220
        %v1237 = vcvt.s32.f32 %v1221
        %v1238 = vcvt.s32.f32 %v1222
        %v1239 = vcvt.s32.f32 %v1223
        %v1240 = vcvt.s32.f32 %v1224
        %v1241 = vcvt.s32.f32 %v1225
        %v1242 = vcvt.s32.f32 %v1226
        %v1243 = vcvt.s32.f32 %v1227
        %v1244 = vcvt.s32.f32 %v1228
        %v1245 = vpack.c.bf16 %v1230, %v1229
        %v1246 = vpack.c.bf16 %v1232, %v1231
        %v1247 = vpack.c.bf16 %v1234, %v1233
        %v1248 = vpack.c.bf16 %v1236, %v1235
        %v1249 = vpack.c.bf16 %v1238, %v1237
        %v1250 = vpack.c.bf16 %v1240, %v1239
        %v1251 = vpack.c.bf16 %v1242, %v1241
        %v1252 = vpack.c.bf16 %v1244, %v1243
        %v1253 = vlaneseq
        %v1254 = vshrl.u32 %v1253, 7
        %v1255 = vsub.s32 0, %v1254
        %v1256 = vrot.slane %v1192, %v1255
        %vm1257 = vcmp.eq.s32.totalorder %v1256, %v321
        %vm1258 = vcmp.eq.s32.totalorder %v1256, %v322
        %vm1259 = vcmp.eq.s32.totalorder %v1256, %v323
        %vm1260 = vcmp.eq.s32.totalorder %v1256, %v324
        %vm1261 = vcmp.eq.s32.totalorder %v1256, %v325
        %vm1262 = vcmp.eq.s32.totalorder %v1256, %v326
        %vm1263 = vcmp.eq.s32.totalorder %v1256, %v327
        %vm1264 = vcmp.eq.s32.totalorder %v1256, %v328
        %vm1265 = vcmp.eq.s32.totalorder %v1256, %v329
        %vm1266 = vcmp.eq.s32.totalorder %v1256, %v330
        %vm1267 = vcmp.eq.s32.totalorder %v1256, %v331
        %vm1268 = vcmp.eq.s32.totalorder %v1256, %v332
        %vm1269 = vcmp.eq.s32.totalorder %v1256, %v333
        %vm1270 = vcmp.eq.s32.totalorder %v1256, %v334
        %vm1271 = vcmp.eq.s32.totalorder %v1256, %v335
        %vm1272 = vcmp.eq.s32.totalorder %v1256, %v336
        %v1273 = vsel %vm1257, 1, 0
        %v1274 = vsel %vm1258, 1, 0
        %v1275 = vsel %vm1259, 1, 0
        %v1276 = vsel %vm1260, 1, 0
        %v1277 = vsel %vm1261, 1, 0
        %v1278 = vsel %vm1262, 1, 0
        %v1279 = vsel %vm1263, 1, 0
        %v1280 = vsel %vm1264, 1, 0
        %v1281 = vsel %vm1265, 1, 0
        %v1282 = vsel %vm1266, 1, 0
        %v1283 = vsel %vm1267, 1, 0
        %v1284 = vsel %vm1268, 1, 0
        %v1285 = vsel %vm1269, 1, 0
        %v1286 = vsel %vm1270, 1, 0
        %v1287 = vsel %vm1271, 1, 0
        %v1288 = vsel %vm1272, 1, 0
        %v1289 = vcvt.s32.f32 %v1273
        %v1290 = vcvt.s32.f32 %v1274
        %v1291 = vcvt.s32.f32 %v1275
        %v1292 = vcvt.s32.f32 %v1276
        %v1293 = vcvt.s32.f32 %v1277
        %v1294 = vcvt.s32.f32 %v1278
        %v1295 = vcvt.s32.f32 %v1279
        %v1296 = vcvt.s32.f32 %v1280
        %v1297 = vcvt.s32.f32 %v1281
        %v1298 = vcvt.s32.f32 %v1282
        %v1299 = vcvt.s32.f32 %v1283
        %v1300 = vcvt.s32.f32 %v1284
        %v1301 = vcvt.s32.f32 %v1285
        %v1302 = vcvt.s32.f32 %v1286
        %v1303 = vcvt.s32.f32 %v1287
        %v1304 = vcvt.s32.f32 %v1288
        %v1305 = vpack.c.bf16 %v1290, %v1289
        %v1306 = vpack.c.bf16 %v1292, %v1291
        %v1307 = vpack.c.bf16 %v1294, %v1293
        %v1308 = vpack.c.bf16 %v1296, %v1295
        %v1309 = vpack.c.bf16 %v1298, %v1297
        %v1310 = vpack.c.bf16 %v1300, %v1299
        %v1311 = vpack.c.bf16 %v1302, %v1301
        %v1312 = vpack.c.bf16 %v1304, %v1303
        %v1313 = vsub.bf16 %v1245, %v1305
        %v1314 = vsub.bf16 %v1246, %v1306
        %v1315 = vsub.bf16 %v1247, %v1307
        %v1316 = vsub.bf16 %v1248, %v1308
        %v1317 = vsub.bf16 %v1249, %v1309
        %v1318 = vsub.bf16 %v1250, %v1310
        %v1319 = vsub.bf16 %v1251, %v1311
        %v1320 = vsub.bf16 %v1252, %v1312
        %1321 = vmatprep.subr.bf16.mxu0 0
        %1322 = vmatpush1.bf16.msra.mxu0 %v1320
        %1323 = vmatprep.subr.bf16.mxu0 0
        %1324 = vmatpush1.bf16.msra.mxu0 %v1319
        %1325 = vmatprep.subr.bf16.mxu0 0
        %1326 = vmatpush1.bf16.msra.mxu0 %v1318
        %1327 = vmatprep.subr.bf16.mxu0 0
        %1328 = vmatpush1.bf16.msra.mxu0 %v1317
        %1329 = vmatprep.subr.bf16.mxu0 0
        %1330 = vmatpush1.bf16.msra.mxu0 %v1316
        %1331 = vmatprep.subr.bf16.mxu0 0
        %1332 = vmatpush1.bf16.msra.mxu0 %v1315
        %1333 = vmatprep.subr.bf16.mxu0 0
        %1334 = vmatpush1.bf16.msra.mxu0 %v1314
        %1335 = vmatprep.subr.bf16.mxu0 0
        %1336 = vmatpush1.bf16.msra.mxu0 %v1313
        %1337 = vmatprep.subr.bf16.mxu0 0
        %1338 = vmatpush2.bf16.msra.mxu0 0
        %1339 = vmatprep.subr.bf16.mxu0 0
        %1340 = vmatpush2.bf16.msra.mxu0 0
        %1341 = vmatprep.subr.bf16.mxu0 0
        %1342 = vmatpush2.bf16.msra.mxu0 0
        %1343 = vmatprep.subr.bf16.mxu0 0
        %1344 = vmatpush2.bf16.msra.mxu0 0
        %1345 = vmatprep.subr.bf16.mxu0 0
        %1346 = vmatpush2.bf16.msra.mxu0 0
        %1347 = vmatprep.subr.bf16.mxu0 0
        %1348 = vmatpush2.bf16.msra.mxu0 0
        %1349 = vmatprep.subr.bf16.mxu0 0
        %1350 = vmatpush2.bf16.msra.mxu0 0
        %1351 = vmatprep.subr.bf16.mxu0 0
        %1352 = vmatpush2.bf16.msra.mxu0 0
        %1353 = vmatprep.mubr.bf16.mxu0 0
        %1354 = vmatmul.mubr.bf16.gmra.mxu0 %v319
        %v1355 = vpop.f32.mrf.mxu0
        %v1356 = vadd.f32 0.0, %v1355
        %v1357 = vpop.f32.mrf.mxu0
        %v1358 = vpop.f32.mrf.mxu0
        %v1359 = vpop.f32.mrf.mxu0
        %1360 = vdwg.mxu0
        %v1361 = vmax.f32 %v1190, %v1356
        %v1362 = vld [vmem:[%s309 + $0x6] sm:$0x1]
        %v1363 = vld [vmem:[%s316 + $0x6] sm:$0x1]
        %v1364 = vlaneseq
        %v1365 = vshrl.u32 %v1364, 7
        %v1366 = vsub.s32 0, %v1365
        %v1367 = vrot.slane %v1362, %v1366
        %vm1368 = vcmp.eq.s32.totalorder %v1367, %v321
        %vm1369 = vcmp.eq.s32.totalorder %v1367, %v322
        %vm1370 = vcmp.eq.s32.totalorder %v1367, %v323
        %vm1371 = vcmp.eq.s32.totalorder %v1367, %v324
        %vm1372 = vcmp.eq.s32.totalorder %v1367, %v325
        %vm1373 = vcmp.eq.s32.totalorder %v1367, %v326
        %vm1374 = vcmp.eq.s32.totalorder %v1367, %v327
        %vm1375 = vcmp.eq.s32.totalorder %v1367, %v328
        %vm1376 = vcmp.eq.s32.totalorder %v1367, %v329
        %vm1377 = vcmp.eq.s32.totalorder %v1367, %v330
        %vm1378 = vcmp.eq.s32.totalorder %v1367, %v331
        %vm1379 = vcmp.eq.s32.totalorder %v1367, %v332
        %vm1380 = vcmp.eq.s32.totalorder %v1367, %v333
        %vm1381 = vcmp.eq.s32.totalorder %v1367, %v334
        %vm1382 = vcmp.eq.s32.totalorder %v1367, %v335
        %vm1383 = vcmp.eq.s32.totalorder %v1367, %v336
        %v1384 = vsel %vm1368, 1, 0
        %v1385 = vsel %vm1369, 1, 0
        %v1386 = vsel %vm1370, 1, 0
        %v1387 = vsel %vm1371, 1, 0
        %v1388 = vsel %vm1372, 1, 0
        %v1389 = vsel %vm1373, 1, 0
        %v1390 = vsel %vm1374, 1, 0
        %v1391 = vsel %vm1375, 1, 0
        %v1392 = vsel %vm1376, 1, 0
        %v1393 = vsel %vm1377, 1, 0
        %v1394 = vsel %vm1378, 1, 0
        %v1395 = vsel %vm1379, 1, 0
        %v1396 = vsel %vm1380, 1, 0
        %v1397 = vsel %vm1381, 1, 0
        %v1398 = vsel %vm1382, 1, 0
        %v1399 = vsel %vm1383, 1, 0
        %v1400 = vcvt.s32.f32 %v1384
        %v1401 = vcvt.s32.f32 %v1385
        %v1402 = vcvt.s32.f32 %v1386
        %v1403 = vcvt.s32.f32 %v1387
        %v1404 = vcvt.s32.f32 %v1388
        %v1405 = vcvt.s32.f32 %v1389
        %v1406 = vcvt.s32.f32 %v1390
        %v1407 = vcvt.s32.f32 %v1391
        %v1408 = vcvt.s32.f32 %v1392
        %v1409 = vcvt.s32.f32 %v1393
        %v1410 = vcvt.s32.f32 %v1394
        %v1411 = vcvt.s32.f32 %v1395
        %v1412 = vcvt.s32.f32 %v1396
        %v1413 = vcvt.s32.f32 %v1397
        %v1414 = vcvt.s32.f32 %v1398
        %v1415 = vcvt.s32.f32 %v1399
        %v1416 = vpack.c.bf16 %v1401, %v1400
        %v1417 = vpack.c.bf16 %v1403, %v1402
        %v1418 = vpack.c.bf16 %v1405, %v1404
        %v1419 = vpack.c.bf16 %v1407, %v1406
        %v1420 = vpack.c.bf16 %v1409, %v1408
        %v1421 = vpack.c.bf16 %v1411, %v1410
        %v1422 = vpack.c.bf16 %v1413, %v1412
        %v1423 = vpack.c.bf16 %v1415, %v1414
        %v1424 = vlaneseq
        %v1425 = vshrl.u32 %v1424, 7
        %v1426 = vsub.s32 0, %v1425
        %v1427 = vrot.slane %v1363, %v1426
        %vm1428 = vcmp.eq.s32.totalorder %v1427, %v321
        %vm1429 = vcmp.eq.s32.totalorder %v1427, %v322
        %vm1430 = vcmp.eq.s32.totalorder %v1427, %v323
        %vm1431 = vcmp.eq.s32.totalorder %v1427, %v324
        %vm1432 = vcmp.eq.s32.totalorder %v1427, %v325
        %vm1433 = vcmp.eq.s32.totalorder %v1427, %v326
        %vm1434 = vcmp.eq.s32.totalorder %v1427, %v327
        %vm1435 = vcmp.eq.s32.totalorder %v1427, %v328
        %vm1436 = vcmp.eq.s32.totalorder %v1427, %v329
        %vm1437 = vcmp.eq.s32.totalorder %v1427, %v330
        %vm1438 = vcmp.eq.s32.totalorder %v1427, %v331
        %vm1439 = vcmp.eq.s32.totalorder %v1427, %v332
        %vm1440 = vcmp.eq.s32.totalorder %v1427, %v333
        %vm1441 = vcmp.eq.s32.totalorder %v1427, %v334
        %vm1442 = vcmp.eq.s32.totalorder %v1427, %v335
        %vm1443 = vcmp.eq.s32.totalorder %v1427, %v336
        %v1444 = vsel %vm1428, 1, 0
        %v1445 = vsel %vm1429, 1, 0
        %v1446 = vsel %vm1430, 1, 0
        %v1447 = vsel %vm1431, 1, 0
        %v1448 = vsel %vm1432, 1, 0
        %v1449 = vsel %vm1433, 1, 0
        %v1450 = vsel %vm1434, 1, 0
        %v1451 = vsel %vm1435, 1, 0
        %v1452 = vsel %vm1436, 1, 0
        %v1453 = vsel %vm1437, 1, 0
        %v1454 = vsel %vm1438, 1, 0
        %v1455 = vsel %vm1439, 1, 0
        %v1456 = vsel %vm1440, 1, 0
        %v1457 = vsel %vm1441, 1, 0
        %v1458 = vsel %vm1442, 1, 0
        %v1459 = vsel %vm1443, 1, 0
        %v1460 = vcvt.s32.f32 %v1444
        %v1461 = vcvt.s32.f32 %v1445
        %v1462 = vcvt.s32.f32 %v1446
        %v1463 = vcvt.s32.f32 %v1447
        %v1464 = vcvt.s32.f32 %v1448
        %v1465 = vcvt.s32.f32 %v1449
        %v1466 = vcvt.s32.f32 %v1450
        %v1467 = vcvt.s32.f32 %v1451
        %v1468 = vcvt.s32.f32 %v1452
        %v1469 = vcvt.s32.f32 %v1453
        %v1470 = vcvt.s32.f32 %v1454
        %v1471 = vcvt.s32.f32 %v1455
        %v1472 = vcvt.s32.f32 %v1456
        %v1473 = vcvt.s32.f32 %v1457
        %v1474 = vcvt.s32.f32 %v1458
        %v1475 = vcvt.s32.f32 %v1459
        %v1476 = vpack.c.bf16 %v1461, %v1460
        %v1477 = vpack.c.bf16 %v1463, %v1462
        %v1478 = vpack.c.bf16 %v1465, %v1464
        %v1479 = vpack.c.bf16 %v1467, %v1466
        %v1480 = vpack.c.bf16 %v1469, %v1468
        %v1481 = vpack.c.bf16 %v1471, %v1470
        %v1482 = vpack.c.bf16 %v1473, %v1472
        %v1483 = vpack.c.bf16 %v1475, %v1474
        %v1484 = vsub.bf16 %v1416, %v1476
        %v1485 = vsub.bf16 %v1417, %v1477
        %v1486 = vsub.bf16 %v1418, %v1478
        %v1487 = vsub.bf16 %v1419, %v1479
        %v1488 = vsub.bf16 %v1420, %v1480
        %v1489 = vsub.bf16 %v1421, %v1481
        %v1490 = vsub.bf16 %v1422, %v1482
        %v1491 = vsub.bf16 %v1423, %v1483
        %1492 = vmatprep.subr.bf16.mxu0 0
        %1493 = vmatpush1.bf16.msra.mxu0 %v1491
        %1494 = vmatprep.subr.bf16.mxu0 0
        %1495 = vmatpush1.bf16.msra.mxu0 %v1490
        %1496 = vmatprep.subr.bf16.mxu0 0
        %1497 = vmatpush1.bf16.msra.mxu0 %v1489
        %1498 = vmatprep.subr.bf16.mxu0 0
        %1499 = vmatpush1.bf16.msra.mxu0 %v1488
        %1500 = vmatprep.subr.bf16.mxu0 0
        %1501 = vmatpush1.bf16.msra.mxu0 %v1487
        %1502 = vmatprep.subr.bf16.mxu0 0
        %1503 = vmatpush1.bf16.msra.mxu0 %v1486
        %1504 = vmatprep.subr.bf16.mxu0 0
        %1505 = vmatpush1.bf16.msra.mxu0 %v1485
        %1506 = vmatprep.subr.bf16.mxu0 0
        %1507 = vmatpush1.bf16.msra.mxu0 %v1484
        %1508 = vmatprep.subr.bf16.mxu0 0
        %1509 = vmatpush2.bf16.msra.mxu0 0
        %1510 = vmatprep.subr.bf16.mxu0 0
        %1511 = vmatpush2.bf16.msra.mxu0 0
        %1512 = vmatprep.subr.bf16.mxu0 0
        %1513 = vmatpush2.bf16.msra.mxu0 0
        %1514 = vmatprep.subr.bf16.mxu0 0
        %1515 = vmatpush2.bf16.msra.mxu0 0
        %1516 = vmatprep.subr.bf16.mxu0 0
        %1517 = vmatpush2.bf16.msra.mxu0 0
        %1518 = vmatprep.subr.bf16.mxu0 0
        %1519 = vmatpush2.bf16.msra.mxu0 0
        %1520 = vmatprep.subr.bf16.mxu0 0
        %1521 = vmatpush2.bf16.msra.mxu0 0
        %1522 = vmatprep.subr.bf16.mxu0 0
        %1523 = vmatpush2.bf16.msra.mxu0 0
        %1524 = vmatprep.mubr.bf16.mxu0 0
        %1525 = vmatmul.mubr.bf16.gmra.mxu0 %v319
        %v1526 = vpop.f32.mrf.mxu0
        %v1527 = vadd.f32 0.0, %v1526
        %v1528 = vpop.f32.mrf.mxu0
        %v1529 = vpop.f32.mrf.mxu0
        %v1530 = vpop.f32.mrf.mxu0
        %1531 = vdwg.mxu0
        %v1532 = vmax.f32 %v1361, %v1527
        %v1533 = vld [vmem:[%s309 + $0x7] sm:$0x1]
        %v1534 = vld [vmem:[%s316 + $0x7] sm:$0x1]
        %v1535 = vlaneseq
        %v1536 = vshrl.u32 %v1535, 7
        %v1537 = vsub.s32 0, %v1536
        %v1538 = vrot.slane %v1533, %v1537
        %vm1539 = vcmp.eq.s32.totalorder %v1538, %v321
        %vm1540 = vcmp.eq.s32.totalorder %v1538, %v322
        %vm1541 = vcmp.eq.s32.totalorder %v1538, %v323
        %vm1542 = vcmp.eq.s32.totalorder %v1538, %v324
        %vm1543 = vcmp.eq.s32.totalorder %v1538, %v325
        %vm1544 = vcmp.eq.s32.totalorder %v1538, %v326
        %vm1545 = vcmp.eq.s32.totalorder %v1538, %v327
        %vm1546 = vcmp.eq.s32.totalorder %v1538, %v328
        %vm1547 = vcmp.eq.s32.totalorder %v1538, %v329
        %vm1548 = vcmp.eq.s32.totalorder %v1538, %v330
        %vm1549 = vcmp.eq.s32.totalorder %v1538, %v331
        %vm1550 = vcmp.eq.s32.totalorder %v1538, %v332
        %vm1551 = vcmp.eq.s32.totalorder %v1538, %v333
        %vm1552 = vcmp.eq.s32.totalorder %v1538, %v334
        %vm1553 = vcmp.eq.s32.totalorder %v1538, %v335
        %vm1554 = vcmp.eq.s32.totalorder %v1538, %v336
        %v1555 = vsel %vm1539, 1, 0
        %v1556 = vsel %vm1540, 1, 0
        %v1557 = vsel %vm1541, 1, 0
        %v1558 = vsel %vm1542, 1, 0
        %v1559 = vsel %vm1543, 1, 0
        %v1560 = vsel %vm1544, 1, 0
        %v1561 = vsel %vm1545, 1, 0
        %v1562 = vsel %vm1546, 1, 0
        %v1563 = vsel %vm1547, 1, 0
        %v1564 = vsel %vm1548, 1, 0
        %v1565 = vsel %vm1549, 1, 0
        %v1566 = vsel %vm1550, 1, 0
        %v1567 = vsel %vm1551, 1, 0
        %v1568 = vsel %vm1552, 1, 0
        %v1569 = vsel %vm1553, 1, 0
        %v1570 = vsel %vm1554, 1, 0
        %v1571 = vcvt.s32.f32 %v1555
        %v1572 = vcvt.s32.f32 %v1556
        %v1573 = vcvt.s32.f32 %v1557
        %v1574 = vcvt.s32.f32 %v1558
        %v1575 = vcvt.s32.f32 %v1559
        %v1576 = vcvt.s32.f32 %v1560
        %v1577 = vcvt.s32.f32 %v1561
        %v1578 = vcvt.s32.f32 %v1562
        %v1579 = vcvt.s32.f32 %v1563
        %v1580 = vcvt.s32.f32 %v1564
        %v1581 = vcvt.s32.f32 %v1565
        %v1582 = vcvt.s32.f32 %v1566
        %v1583 = vcvt.s32.f32 %v1567
        %v1584 = vcvt.s32.f32 %v1568
        %v1585 = vcvt.s32.f32 %v1569
        %v1586 = vcvt.s32.f32 %v1570
        %v1587 = vpack.c.bf16 %v1572, %v1571
        %v1588 = vpack.c.bf16 %v1574, %v1573
        %v1589 = vpack.c.bf16 %v1576, %v1575
        %v1590 = vpack.c.bf16 %v1578, %v1577
        %v1591 = vpack.c.bf16 %v1580, %v1579
        %v1592 = vpack.c.bf16 %v1582, %v1581
        %v1593 = vpack.c.bf16 %v1584, %v1583
        %v1594 = vpack.c.bf16 %v1586, %v1585
        %v1595 = vlaneseq
        %v1596 = vshrl.u32 %v1595, 7
        %v1597 = vsub.s32 0, %v1596
        %v1598 = vrot.slane %v1534, %v1597
        %vm1599 = vcmp.eq.s32.totalorder %v1598, %v321
        %vm1600 = vcmp.eq.s32.totalorder %v1598, %v322
        %vm1601 = vcmp.eq.s32.totalorder %v1598, %v323
        %vm1602 = vcmp.eq.s32.totalorder %v1598, %v324
        %vm1603 = vcmp.eq.s32.totalorder %v1598, %v325
        %vm1604 = vcmp.eq.s32.totalorder %v1598, %v326
        %vm1605 = vcmp.eq.s32.totalorder %v1598, %v327
        %vm1606 = vcmp.eq.s32.totalorder %v1598, %v328
        %vm1607 = vcmp.eq.s32.totalorder %v1598, %v329
        %vm1608 = vcmp.eq.s32.totalorder %v1598, %v330
        %vm1609 = vcmp.eq.s32.totalorder %v1598, %v331
        %vm1610 = vcmp.eq.s32.totalorder %v1598, %v332
        %vm1611 = vcmp.eq.s32.totalorder %v1598, %v333
        %vm1612 = vcmp.eq.s32.totalorder %v1598, %v334
        %vm1613 = vcmp.eq.s32.totalorder %v1598, %v335
        %vm1614 = vcmp.eq.s32.totalorder %v1598, %v336
        %v1615 = vsel %vm1599, 1, 0
        %v1616 = vsel %vm1600, 1, 0
        %v1617 = vsel %vm1601, 1, 0
        %v1618 = vsel %vm1602, 1, 0
        %v1619 = vsel %vm1603, 1, 0
        %v1620 = vsel %vm1604, 1, 0
        %v1621 = vsel %vm1605, 1, 0
        %v1622 = vsel %vm1606, 1, 0
        %v1623 = vsel %vm1607, 1, 0
        %v1624 = vsel %vm1608, 1, 0
        %v1625 = vsel %vm1609, 1, 0
        %v1626 = vsel %vm1610, 1, 0
        %v1627 = vsel %vm1611, 1, 0
        %v1628 = vsel %vm1612, 1, 0
        %v1629 = vsel %vm1613, 1, 0
        %v1630 = vsel %vm1614, 1, 0
        %v1631 = vcvt.s32.f32 %v1615
        %v1632 = vcvt.s32.f32 %v1616
        %v1633 = vcvt.s32.f32 %v1617
        %v1634 = vcvt.s32.f32 %v1618
        %v1635 = vcvt.s32.f32 %v1619
        %v1636 = vcvt.s32.f32 %v1620
        %v1637 = vcvt.s32.f32 %v1621
        %v1638 = vcvt.s32.f32 %v1622
        %v1639 = vcvt.s32.f32 %v1623
        %v1640 = vcvt.s32.f32 %v1624
        %v1641 = vcvt.s32.f32 %v1625
        %v1642 = vcvt.s32.f32 %v1626
        %v1643 = vcvt.s32.f32 %v1627
        %v1644 = vcvt.s32.f32 %v1628
        %v1645 = vcvt.s32.f32 %v1629
        %v1646 = vcvt.s32.f32 %v1630
        %v1647 = vpack.c.bf16 %v1632, %v1631
        %v1648 = vpack.c.bf16 %v1634, %v1633
        %v1649 = vpack.c.bf16 %v1636, %v1635
        %v1650 = vpack.c.bf16 %v1638, %v1637
        %v1651 = vpack.c.bf16 %v1640, %v1639
        %v1652 = vpack.c.bf16 %v1642, %v1641
        %v1653 = vpack.c.bf16 %v1644, %v1643
        %v1654 = vpack.c.bf16 %v1646, %v1645
        %v1655 = vsub.bf16 %v1587, %v1647
        %v1656 = vsub.bf16 %v1588, %v1648
        %v1657 = vsub.bf16 %v1589, %v1649
        %v1658 = vsub.bf16 %v1590, %v1650
        %v1659 = vsub.bf16 %v1591, %v1651
        %v1660 = vsub.bf16 %v1592, %v1652
        %v1661 = vsub.bf16 %v1593, %v1653
        %v1662 = vsub.bf16 %v1594, %v1654
        %1663 = vmatprep.subr.bf16.mxu0 0
        %1664 = vmatpush1.bf16.msra.mxu0 %v1662
        %1665 = vmatprep.subr.bf16.mxu0 0
        %1666 = vmatpush1.bf16.msra.mxu0 %v1661
        %1667 = vmatprep.subr.bf16.mxu0 0
        %1668 = vmatpush1.bf16.msra.mxu0 %v1660
        %1669 = vmatprep.subr.bf16.mxu0 0
        %1670 = vmatpush1.bf16.msra.mxu0 %v1659
        %1671 = vmatprep.subr.bf16.mxu0 0
        %1672 = vmatpush1.bf16.msra.mxu0 %v1658
        %1673 = vmatprep.subr.bf16.mxu0 0
        %1674 = vmatpush1.bf16.msra.mxu0 %v1657
        %1675 = vmatprep.subr.bf16.mxu0 0
        %1676 = vmatpush1.bf16.msra.mxu0 %v1656
        %1677 = vmatprep.subr.bf16.mxu0 0
        %1678 = vmatpush1.bf16.msra.mxu0 %v1655
        %1679 = vmatprep.subr.bf16.mxu0 0
        %1680 = vmatpush2.bf16.msra.mxu0 0
        %1681 = vmatprep.subr.bf16.mxu0 0
        %1682 = vmatpush2.bf16.msra.mxu0 0
        %1683 = vmatprep.subr.bf16.mxu0 0
        %1684 = vmatpush2.bf16.msra.mxu0 0
        %1685 = vmatprep.subr.bf16.mxu0 0
        %1686 = vmatpush2.bf16.msra.mxu0 0
        %1687 = vmatprep.subr.bf16.mxu0 0
        %1688 = vmatpush2.bf16.msra.mxu0 0
        %1689 = vmatprep.subr.bf16.mxu0 0
        %1690 = vmatpush2.bf16.msra.mxu0 0
        %1691 = vmatprep.subr.bf16.mxu0 0
        %1692 = vmatpush2.bf16.msra.mxu0 0
        %1693 = vmatprep.subr.bf16.mxu0 0
        %1694 = vmatpush2.bf16.msra.mxu0 0
        %1695 = vmatprep.mubr.bf16.mxu0 0
        %1696 = vmatmul.mubr.bf16.gmra.mxu0 %v319
        %v1697 = vpop.f32.mrf.mxu0
        %v1698 = vadd.f32 0.0, %v1697
        %v1699 = vpop.f32.mrf.mxu0
        %v1700 = vpop.f32.mrf.mxu0
        %v1701 = vpop.f32.mrf.mxu0
        %1702 = vdwg.mxu0
        %v1703 = vmax.f32 %v1532, %v1698
        %s1704 = sshra.s32 %s318, 7
        %s1705 = sand.u32 %s318, 127
        %s1706 = smul.addr %s1704, 2
        %s1707 = scalar_lea.vmem %s302, %s1706
        %v1708 = vld [vmem:[%s1707] sm:$0x3]
        %v1709 = vld [vmem:[%s3] sm:$0xf]
        %v1710 = vld [vmem:[%s4] sm:$0xf]
        %v1711 = vpack.c.bf16 %v1703, %v1703
        %vm1712 = vcmask 31744
        %v1714 = vsel %vm1712, %v1710, 0
        %vm1716 = vcmask 1041408
        %v1718 = vsel %vm1716, %v1711, 0
        %1720 = vmatprep.subr.bf16.mxu0 0
        %1721 = vmatpush1.bf16.msra.mxu0 0
        %1722 = vmatprep.subr.bf16.mxu0 0
        %1723 = vmatpush1.bf16.msra.mxu0 0
        %1724 = vmatprep.subr.bf16.mxu0 0
        %1725 = vmatpush1.bf16.msra.mxu0 0
        %1726 = vmatprep.subr.bf16.mxu0 0
        %1727 = vmatpush1.bf16.msra.mxu0 0
        %1728 = vmatprep.subr.bf16.mxu0 0
        %1729 = vmatpush1.bf16.msra.mxu0 0
        %1730 = vmatprep.subr.bf16.mxu0 0
        %1731 = vmatpush1.bf16.msra.mxu0 0
        %1732 = vmatprep.subr.bf16.mxu0 0
        %1733 = vmatpush1.bf16.msra.mxu0 0
        %1734 = vmatprep.subr.bf16.mxu0 0
        %1735 = vmatpush1.bf16.msra.mxu0 %v1718
        %1736 = vmatprep.subr.bf16.mxu0 0
        %1737 = vmatpush2.bf16.msra.mxu0 0
        %1738 = vmatprep.subr.bf16.mxu0 0
        %1739 = vmatpush2.bf16.msra.mxu0 0
        %1740 = vmatprep.subr.bf16.mxu0 0
        %1741 = vmatpush2.bf16.msra.mxu0 0
        %1742 = vmatprep.subr.bf16.mxu0 0
        %1743 = vmatpush2.bf16.msra.mxu0 0
        %1744 = vmatprep.subr.bf16.mxu0 0
        %1745 = vmatpush2.bf16.msra.mxu0 0
        %1746 = vmatprep.subr.bf16.mxu0 0
        %1747 = vmatpush2.bf16.msra.mxu0 0
        %1748 = vmatprep.subr.bf16.mxu0 0
        %1749 = vmatpush2.bf16.msra.mxu0 0
        %1750 = vmatprep.subr.bf16.mxu0 0
        %1751 = vmatpush2.bf16.msra.mxu0 0
        %1752 = vmatprep.mubr.bf16.mxu0 0
        %1753 = vmatmul.mubr.bf16.gmra.mxu0 %v1714
        %v1754 = vpop.f32.mrf.mxu0
        %v1755 = vadd.f32 0.0, %v1754
        %v1756 = vpop.f32.mrf.mxu0
        %v1757 = vpop.f32.mrf.mxu0
        %v1758 = vpop.f32.mrf.mxu0
        %1759 = vdwg.mxu0
        %v1761 = vsel %vm1712, %v1709, 0
        %v1764 = vsel %vm1716, %v1708, 0
        %1766 = vmatprep.subr.bf16.mxu0 0
        %1767 = vmatpush1.bf16.msra.mxu0 0
        %1768 = vmatprep.subr.bf16.mxu0 0
        %1769 = vmatpush1.bf16.msra.mxu0 0
        %1770 = vmatprep.subr.bf16.mxu0 0
        %1771 = vmatpush1.bf16.msra.mxu0 0
        %1772 = vmatprep.subr.bf16.mxu0 0
        %1773 = vmatpush1.bf16.msra.mxu0 0
        %1774 = vmatprep.subr.bf16.mxu0 0
        %1775 = vmatpush1.bf16.msra.mxu0 0
        %1776 = vmatprep.subr.bf16.mxu0 0
        %1777 = vmatpush1.bf16.msra.mxu0 0
        %1778 = vmatprep.subr.bf16.mxu0 0
        %1779 = vmatpush1.bf16.msra.mxu0 0
        %1780 = vmatprep.subr.bf16.mxu0 0
        %1781 = vmatpush1.bf16.msra.mxu0 %v1764
        %1782 = vmatprep.subr.bf16.mxu0 0
        %1783 = vmatpush2.bf16.msra.mxu0 0
        %1784 = vmatprep.subr.bf16.mxu0 0
        %1785 = vmatpush2.bf16.msra.mxu0 0
        %1786 = vmatprep.subr.bf16.mxu0 0
        %1787 = vmatpush2.bf16.msra.mxu0 0
        %1788 = vmatprep.subr.bf16.mxu0 0
        %1789 = vmatpush2.bf16.msra.mxu0 0
        %1790 = vmatprep.subr.bf16.mxu0 0
        %1791 = vmatpush2.bf16.msra.mxu0 0
        %1792 = vmatprep.subr.bf16.mxu0 0
        %1793 = vmatpush2.bf16.msra.mxu0 0
        %1794 = vmatprep.subr.bf16.mxu0 0
        %1795 = vmatpush2.bf16.msra.mxu0 0
        %1796 = vmatprep.subr.bf16.mxu0 0
        %1797 = vmatpush2.bf16.msra.mxu0 0
        %1798 = vmatprep.mubr.bf16.mxu0 0
        %1799 = vmatmul.mubr.bf16.gmra.mxu0 %v1761
        %v1800 = vpop.f32.mrf.mxu0
        %v1801 = vadd.f32 %v1755, %v1800
        %v1802 = vpop.f32.mrf.mxu0
        %v1803 = vpop.f32.mrf.mxu0
        %v1804 = vpop.f32.mrf.mxu0
        %1805 = vdwg.mxu0
        %v1806 = vld [vmem:[%s5] sm:$0xff]
        %1808 = vset.pattern.permute.xlu0 0
        %1809 = vperm.xlu0 %1808, %v1806
        %v1810 = vpop.permute.xlu0 %1809
        %v1812 = vadd.f32 %v1801, %v1810
        %v1813 = vmax.f32 %v1812, 0.0
        %1814 = vst [vmem:[%s298] sm:$0xff] %v1813
        %s1815 = sand.u32 %s187, 1
        %s1816 = scalar_lea.sflag [#allocation3], %s1815
        %s1817 = sand.u32 %s187, 1
        %s1818 = smul.addr %s1817, 8
        %s1819 = scalar_lea.vmem [#allocation2], %s1818
        // Predicated region
        $region45: #{mrconv2d_forward.1} parent=43 // pred_check
          %p1820 = pneg %p197
        $region46: #{mrconv2d_forward.1} parent=43 // pred_check_branch
          %1822 = sbr.rel (%p1820) target = $region48
        $region47: #{mrconv2d_forward.1} parent=43 // pred_region
          %s1824 = ssub.s32 128, 128
          %1825 = vsyncadd %s1816, %s1824
          %s1826 = sadd.s32 %s25, %s24
          %s1827 = smul.addr %s1826, 128
          %s1828 = scalar_lea.hbm %s6, %s1827
          %s1830 = sshll.u32 %s1819, 4
          %s1831 = int_to_ptr.vmem [resolvable:$true] %s1830
          %1833 = dma.vmem_to_hbm [thread:$0]  %s1831, 128, %s1828, %s1816
        $region48: #{mrconv2d_forward.1} parent=43 // pred_fallthru
          _
      $region44: #{mrconv2d_forward.1} parent=5 // pred_fallthru
        _
      %p1834 = scmp.le.s32.totalorder 2, %s15
      // Predicated region
      $region49: #{mrconv2d_forward.1} parent=5 // pred_check
        %p1835 = pneg %p1834
      $region50: #{mrconv2d_forward.1} parent=5 // pred_check_branch
        %1837 = sbr.rel (%p1835) target = $region52
      $region51: #{mrconv2d_forward.1} parent=5 // pred_region
        %s1838 = ssub.s32 %s15, 2
        // Predicated region
        $region53: #{mrconv2d_forward.1} parent=51 // pred_check
          %p1839 = pneg %p203
        $region54: #{mrconv2d_forward.1} parent=51 // pred_check_branch
          %1841 = sbr.rel (%p1839) target = $region56
        $region55: #{mrconv2d_forward.1} parent=51 // pred_region
          %s1842 = sand.u32 %s188, 1
          %s1843 = scalar_lea.sflag [#allocation3], %s1842
          %s1844 = sand.u32 %s188, 1
          %s1845 = smul.addr %s1844, 8
          %s1846 = scalar_lea.vmem [#allocation2], %s1845
          %1847 = dma.done %s1843, 128
        $region56: #{mrconv2d_forward.1} parent=51 // pred_fallthru
          _
      $region52: #{mrconv2d_forward.1} parent=5 // pred_fallthru
        _
    $region6: #{mrconv2d_forward.1} parent=1 // loop_footer
      %s19 = sadd.s32 1, %s15
    $region7: #{mrconv2d_forward.1} parent=1 // loop_footer_branch
      %14 = sbr.rel target = $region3
    $region8: #{mrconv2d_forward.1} parent=1 // loop_exit
      _
    %1848 = vsyncpa [#allocation3], 1
    %s1849 = scalar_lea.sflag [#allocation3], 1
    %1850 = vsyncpa %s1849, 1

</llo_original>
